<compile_context>
chip_gen: v7x
topology: tpu7x:2x2x1
jax: 0.10.0
libtpu: 0.0.40
codegen_flags: <defaults>
</compile_context>

<pallas_src>
import functools

import jax
import jax.numpy as jnp
from jax import lax
from jax.experimental import pallas as pl
from jax.experimental.pallas import tpu as pltpu


def _pick_row_strip(ho: int, target: int = 8) -> int:
    """Largest divisor of `ho` that is <= target (falls back to 1-row strips)."""
    for rs in range(min(target, ho), 0, -1):
        if ho % rs == 0:
            return rs
    return ho


# ------------------------------ fused kernel --------------------------------

def _dsc_fused_kernel(x_ref, dww_ref, dwb_ref, pww_ref, pwb_ref, o_ref,
                      xpad_ref, *, K, P, H, W, Ho, Wo, Cin, Cout, RS):
    # x_ref:    (H, W, Cin)        one batch element (NHWC, channels on lanes)
    # dww_ref:  (K*K, 1, Cin)      depthwise taps, row-major (kh, kw)
    # dwb_ref:  (1, Cin)
    # pww_ref:  (Cin, Cout)
    # pwb_ref:  (1, Cout)
    # o_ref:    (Ho, Wo, Cout)
    # xpad_ref: VMEM scratch (H + 2P, W + 2P, Cin)
    Hp, Wp = H + 2 * P, W + 2 * P

    # Stage the zero-padded input tile in VMEM.  Only the thin halo strips are
    # zeroed (per step -> correct under "parallel" megacore splitting); the
    # interior is overwritten every step.  NOTE: valid only for stride=1 /
    # dilation=1 where no step ever writes into the halo region.
    if P > 0:
        xpad_ref[0:P, :, :] = jnp.zeros((P, Wp, Cin), jnp.float32)
        xpad_ref[P + H:Hp, :, :] = jnp.zeros((P, Wp, Cin), jnp.float32)
        xpad_ref[P:P + H, 0:P, :] = jnp.zeros((H, P, Cin), jnp.float32)
        xpad_ref[P:P + H, P + W:Wp, :] = jnp.zeros((H, P, Cin), jnp.float32)
    xpad_ref[P:P + H, P:P + W, :] = x_ref[...]

    # Weights: load once, hoist out of all loops.
    w_taps = dww_ref[...]                            # (K*K, 1, Cin) f32
    dwb = dwb_ref[...]                               # (1, Cin)
    pww = pww_ref[...].astype(jnp.bfloat16)          # (Cin, Cout) MXU operand
    pwb = pwb_ref[...]                               # (1, Cout)

    n_strips = Ho // RS

    def strip_body(s, carry):
        r0 = pl.multiple_of(s * RS, RS)

        # Depthwise KxK on an RS-row output strip: K slab loads (one per kh),
        # kw shifts as in-register sublane slices, broadcast MACs on the VPU
        # in f32 (safe on v5e; bf16 VPU path left for v6e/v7x tuning).
        acc = jnp.zeros((RS, Wo, Cin), jnp.float32)
        for kh in range(K):
            slab = xpad_ref[pl.ds(r0 + kh, RS), :, :]        # (RS, Wp, Cin)
            for kw in range(K):
                acc = acc + slab[:, kw:kw + Wo, :] * w_taps[kh * K + kw]
        acc = acc + dwb

        # Pointwise 1x1 for this strip: (RS*Wo, Cin) @ (Cin, Cout) on the MXU,
        # bf16 operands / f32 accumulate.
        y = jnp.dot(acc.reshape(RS * Wo, Cin).astype(jnp.bfloat16), pww,
                    preferred_element_type=jnp.float32)
        y = y + pwb
        o_ref[pl.ds(r0, RS), :, :] = y.reshape(RS, Wo, Cout)  # lane-dense store
        return carry

    lax.fori_loop(0, n_strips, strip_body, 0, unroll=True)


# -------------------------------- wrappers ------------------------------------

def depthwise_separable_conv2d_nhwc(x_nhwc, dw_w, dw_b, pw_w, pw_b, *, padding):
    """NHWC-native fused depthwise-separable conv (no layout transposes)."""
    N, H, W, Cin = x_nhwc.shape
    Cout = pw_w.shape[0]
    K = dw_w.shape[-1]
    P = padding
    Ho = H + 2 * P - K + 1
    Wo = W + 2 * P - K + 1
    RS = _pick_row_strip(Ho)

    # Lane-friendly weight layouts.
    dww = jnp.transpose(dw_w.reshape(Cin, K * K), (1, 0)).reshape(K * K, 1, Cin)
    dww = dww.astype(jnp.float32)
    dwb = dw_b.reshape(1, Cin).astype(jnp.float32)
    pww = jnp.transpose(pw_w.reshape(Cout, Cin), (1, 0)).astype(jnp.float32)
    pwb = pw_b.reshape(1, Cout).astype(jnp.float32)

    kernel = functools.partial(_dsc_fused_kernel, K=K, P=P, H=H, W=W,
                               Ho=Ho, Wo=Wo, Cin=Cin, Cout=Cout, RS=RS)

    return pl.pallas_call(
        kernel,
        out_shape=jax.ShapeDtypeStruct((N, Ho, Wo, Cout), jnp.float32),
        grid=(N,),
        in_specs=[
            pl.BlockSpec((None, H, W, Cin), lambda n: (n, 0, 0, 0)),
            pl.BlockSpec((K * K, 1, Cin), lambda n: (0, 0, 0)),
            pl.BlockSpec((1, Cin), lambda n: (0, 0)),
            pl.BlockSpec((Cin, Cout), lambda n: (0, 0)),
            pl.BlockSpec((1, Cout), lambda n: (0, 0)),
        ],
        out_specs=pl.BlockSpec((None, Ho, Wo, Cout), lambda n: (n, 0, 0, 0)),
        scratch_shapes=[pltpu.VMEM((H + 2 * P, W + 2 * P, Cin), jnp.float32)],
        compiler_params=pltpu.CompilerParams(
            dimension_semantics=("parallel",),
            vmem_limit_bytes=32 * 1024 * 1024),
    )(x_nhwc.astype(jnp.float32), dww, dwb, pww, pwb)


def depthwise_separable_conv2d(x_nchw, dw_w, dw_b, pw_w, pw_b, *, padding):
    """PyTorch-layout forward: (N, Cin, H, W) -> (N, Cout, Ho, Wo)."""
    x = jnp.transpose(x_nchw, (0, 2, 3, 1))            # NCHW -> NHWC
    out = depthwise_separable_conv2d_nhwc(x, dw_w, dw_b, pw_w, pw_b,
                                          padding=padding)
    return jnp.transpose(out, (0, 3, 1, 2))            # NHWC -> NCHW


# --------------------------- pure-JAX references ------------------------------

def _ref_f32(x, dw_w, dw_b, pw_w, pw_b, *, padding):
    """Full-f32 reference (PyTorch-module semantics)."""
    Cin = x.shape[1]
    y = lax.conv_general_dilated(
        x, dw_w, (1, 1), [(padding, padding), (padding, padding)],
        dimension_numbers=('NCHW', 'OIHW', 'NCHW'),
        feature_group_count=Cin,
        precision=lax.Precision.HIGHEST) + dw_b[None, :, None, None]
    z = lax.conv_general_dilated(
        y, pw_w, (1, 1), 'VALID',
        dimension_numbers=('NCHW', 'OIHW', 'NCHW'),
        precision=lax.Precision.HIGHEST) + pw_b[None, :, None, None]
    return z


def _ref_mxu(x, dw_w, dw_b, pw_w, pw_b, *, padding):
    """Reference with the same bf16-operand / f32-accumulate pointwise numerics
    as the kernel's MXU matmul (depthwise stays f32)."""
    Cin = x.shape[1]
    Cout = pw_w.shape[0]
    y = lax.conv_general_dilated(
        x, dw_w, (1, 1), [(padding, padding), (padding, padding)],
        dimension_numbers=('NCHW', 'OIHW', 'NCHW'),
        feature_group_count=Cin,
        precision=lax.Precision.HIGHEST) + dw_b[None, :, None, None]
    N, _, Ho, Wo = y.shape
    yt = jnp.transpose(y, (0, 2, 3, 1)).reshape(-1, Cin).astype(jnp.bfloat16)
    w = jnp.transpose(pw_w.reshape(Cout, Cin), (1, 0)).astype(jnp.bfloat16)
    z = jnp.dot(yt, w, preferred_element_type=jnp.float32) + pw_b[None, :]
    return jnp.transpose(z.reshape(N, Ho, Wo, Cout), (0, 3, 1, 2))


# ----------------------------------- main -------------------------------------

if __name__ == "__main__":
    key = jax.random.PRNGKey(0)
    k_x, k_dw, k_db, k_pw, k_pb = jax.random.split(key, 5)

    # Small deterministic test: in_channels=64, out_channels=128, k=3, pad=1.
    N, Cin, Cout, H, W, K, P = 2, 64, 128, 16, 16, 3, 1

    x = jax.random.normal(k_x, (N, Cin, H, W), jnp.float32)
    dw_w = jax.random.normal(k_dw, (Cin, 1, K, K), jnp.float32) * (2.0 / (K * K)) ** 0.5
    dw_b = jax.random.normal(k_db, (Cin,), jnp.float32) * 0.01
    pw_w = jax.random.normal(k_pw, (Cout, Cin, 1, 1), jnp.float32) * (2.0 / Cin) ** 0.5
    pw_b = jax.random.normal(k_pb, (Cout,), jnp.float32) * 0.01

    fwd = jax.jit(functools.partial(depthwise_separable_conv2d, padding=P))
    out = jax.block_until_ready(fwd(x, dw_w, dw_b, pw_w, pw_b))
    assert out.shape == (N, Cout, H, W), out.shape

    # Tight check vs a reference with identical (bf16-operand) MXU numerics.
    ref_mxu = jax.block_until_ready(
        jax.jit(functools.partial(_ref_mxu, padding=P))(x, dw_w, dw_b, pw_w, pw_b))
    if not jnp.allclose(out, ref_mxu, rtol=1e-2, atol=1e-2):
        raise AssertionError(
            f"mismatch vs bf16-MXU reference, max abs err "
            f"{jnp.max(jnp.abs(out - ref_mxu))}")

    # Loose sanity check vs the full-f32 module semantics (bf16 operand noise).
    ref_f32 = jax.block_until_ready(
        jax.jit(functools.partial(_ref_f32, padding=P))(x, dw_w, dw_b, pw_w, pw_b))
    if not jnp.allclose(out, ref_f32, rtol=5e-2, atol=5e-2):
        raise AssertionError(
            f"mismatch vs f32 reference, max abs err "
            f"{jnp.max(jnp.abs(out - ref_f32))}")

    print("KERNEL_OK")
</pallas_src>

<mosaic_0001>
module attributes {stable_mosaic.version = 11 : i64} {
  func.func @_dsc_fused_kernel(%arg0: i32, %arg1: memref<1x16x16x64xf32, #tpu.memory_space<vmem>>, %arg2: memref<9x1x64xf32, #tpu.memory_space<vmem>>, %arg3: memref<1x64xf32, #tpu.memory_space<vmem>>, %arg4: memref<64x128xf32, #tpu.memory_space<vmem>>, %arg5: memref<1x128xf32, #tpu.memory_space<vmem>>, %arg6: memref<1x16x16x128xf32, #tpu.memory_space<vmem>>, %arg7: memref<18x18x64xf32, #tpu.memory_space<vmem>>) attributes {dimension_semantics = [#tpu.dimension_semantics<parallel>], iteration_bounds = array<i64: 2>, scalar_prefetch = 0 : i64, scratch_operands = 1 : i64, tpu.core_type = #tpu.core_type<tc>, window_params = [{transform_indices = @transform_0, window_bounds = array<i64: 1, 16, 16, 64>}, {pipeline_mode = #tpu.pipeline_mode<synchronous>, transform_indices = @transform_1, window_bounds = array<i64: 9, 1, 64>}, {pipeline_mode = #tpu.pipeline_mode<synchronous>, transform_indices = @transform_2, window_bounds = array<i64: 1, 64>}, {pipeline_mode = #tpu.pipeline_mode<synchronous>, transform_indices = @transform_3, window_bounds = array<i64: 64, 128>}, {pipeline_mode = #tpu.pipeline_mode<synchronous>, transform_indices = @transform_4, window_bounds = array<i64: 1, 128>}, {transform_indices = @transform_5, window_bounds = array<i64: 1, 16, 16, 128>}]} {
    %cst = arith.constant 0.000000e+00 : f32
    %0 = vector.broadcast %cst : f32 to vector<1x18x64xf32>
    %c0 = arith.constant 0 : index
    %c0_0 = arith.constant 0 : index
    %c0_1 = arith.constant 0 : index
    %1 = vector.load %arg7[%c0, %c0_0, %c0_1] : memref<18x18x64xf32, #tpu.memory_space<vmem>>, vector<1x18x64xf32>
    tpu.vector_store %arg7[%c0, %c0_0, %c0_1], %0 {strides = array<i32>} : memref<18x18x64xf32, #tpu.memory_space<vmem>>, vector<1x18x64xf32>,
    %cst_2 = arith.constant 0.000000e+00 : f32
    %2 = vector.broadcast %cst_2 : f32 to vector<1x18x64xf32>
    %c17 = arith.constant 17 : index
    %c0_3 = arith.constant 0 : index
    %c0_4 = arith.constant 0 : index
    %3 = vector.load %arg7[%c17, %c0_3, %c0_4] : memref<18x18x64xf32, #tpu.memory_space<vmem>>, vector<1x18x64xf32>
    tpu.vector_store %arg7[%c17, %c0_3, %c0_4], %2 {strides = array<i32>} : memref<18x18x64xf32, #tpu.memory_space<vmem>>, vector<1x18x64xf32>,
    %cst_5 = arith.constant 0.000000e+00 : f32
    %4 = vector.broadcast %cst_5 : f32 to vector<16x1x64xf32>
    %c1 = arith.constant 1 : index
    %c0_6 = arith.constant 0 : index
    %c0_7 = arith.constant 0 : index
    %5 = vector.load %arg7[%c1, %c0_6, %c0_7] : memref<18x18x64xf32, #tpu.memory_space<vmem>>, vector<16x1x64xf32>
    tpu.vector_store %arg7[%c1, %c0_6, %c0_7], %4 {strides = array<i32>} : memref<18x18x64xf32, #tpu.memory_space<vmem>>, vector<16x1x64xf32>,
    %cst_8 = arith.constant 0.000000e+00 : f32
    %6 = vector.broadcast %cst_8 : f32 to vector<16x1x64xf32>
    %c1_9 = arith.constant 1 : index
    %c17_10 = arith.constant 17 : index
    %c0_11 = arith.constant 0 : index
    %7 = vector.load %arg7[%c1_9, %c17_10, %c0_11] : memref<18x18x64xf32, #tpu.memory_space<vmem>>, vector<16x1x64xf32>
    tpu.vector_store %arg7[%c1_9, %c17_10, %c0_11], %6 {strides = array<i32>} : memref<18x18x64xf32, #tpu.memory_space<vmem>>, vector<16x1x64xf32>,
    %c0_12 = arith.constant 0 : index
    %c0_13 = arith.constant 0 : index
    %c0_14 = arith.constant 0 : index
    %c0_15 = arith.constant 0 : index
    %8 = vector.load %arg1[%c0_12, %c0_13, %c0_14, %c0_15] : memref<1x16x16x64xf32, #tpu.memory_space<vmem>>, vector<1x16x16x64xf32>
    %9 = vector.shape_cast %8 : vector<1x16x16x64xf32> to vector<16x16x64xf32>
    %c1_16 = arith.constant 1 : index
    %c1_17 = arith.constant 1 : index
    %c0_18 = arith.constant 0 : index
    %10 = vector.load %arg7[%c1_16, %c1_17, %c0_18] : memref<18x18x64xf32, #tpu.memory_space<vmem>>, vector<16x16x64xf32>
    tpu.vector_store %arg7[%c1_16, %c1_17, %c0_18], %9 {strides = array<i32>} : memref<18x18x64xf32, #tpu.memory_space<vmem>>, vector<16x16x64xf32>,
    %c0_19 = arith.constant 0 : index
    %c0_20 = arith.constant 0 : index
    %c0_21 = arith.constant 0 : index
    %11 = vector.load %arg2[%c0_19, %c0_20, %c0_21] : memref<9x1x64xf32, #tpu.memory_space<vmem>>, vector<9x1x64xf32>
    %c0_22 = arith.constant 0 : index
    %c0_23 = arith.constant 0 : index
    %12 = vector.load %arg3[%c0_22, %c0_23] : memref<1x64xf32, #tpu.memory_space<vmem>>, vector<1x64xf32>
    %c0_24 = arith.constant 0 : index
    %c0_25 = arith.constant 0 : index
    %13 = vector.load %arg4[%c0_24, %c0_25] : memref<64x128xf32, #tpu.memory_space<vmem>>, vector<64x128xf32>
    %14 = arith.truncf %13 : vector<64x128xf32> to vector<64x128xbf16>
    %c0_26 = arith.constant 0 : index
    %c0_27 = arith.constant 0 : index
    %15 = vector.load %arg5[%c0_26, %c0_27] : memref<1x128xf32, #tpu.memory_space<vmem>>, vector<1x128xf32>
    %c0_i32 = arith.constant 0 : i32
    %c8_i32 = arith.constant 8 : i32
    %16 = arith.muli %c0_i32, %c8_i32 : i32
    %17 = tpu.assume_multiple %16, 8 : i32
    %cst_28 = arith.constant 0.000000e+00 : f32
    %18 = vector.broadcast %cst_28 : f32 to vector<8x16x64xf32>
    %c0_i32_29 = arith.constant 0 : i32
    %19 = arith.addi %17, %c0_i32_29 : i32
    %20 = arith.index_cast %19 : i32 to index
    %c0_30 = arith.constant 0 : index
    %c0_31 = arith.constant 0 : index
    %21 = vector.load %arg7[%20, %c0_30, %c0_31] : memref<18x18x64xf32, #tpu.memory_space<vmem>>, vector<8x18x64xf32>
    %22 = vector.extract_strided_slice %21 {offsets = [0, 0, 0], sizes = [8, 16, 64], strides = [1, 1, 1]} : vector<8x18x64xf32> to vector<8x16x64xf32>
    %23 = vector.extract_strided_slice %11 {offsets = [0, 0, 0], sizes = [1, 1, 64], strides = [1, 1, 1]} : vector<9x1x64xf32> to vector<1x1x64xf32>
    %24 = vector.shape_cast %23 : vector<1x1x64xf32> to vector<1x64xf32>
    %25 = vector.shape_cast %24 : vector<1x64xf32> to vector<1x1x64xf32>
    %26 = vector.broadcast %25 : vector<1x1x64xf32> to vector<8x16x64xf32>
    %27 = arith.mulf %22, %26 : vector<8x16x64xf32>
    %28 = arith.addf %18, %27 : vector<8x16x64xf32>
    %29 = vector.extract_strided_slice %21 {offsets = [0, 1, 0], sizes = [8, 16, 64], strides = [1, 1, 1]} : vector<8x18x64xf32> to vector<8x16x64xf32>
    %30 = vector.extract_strided_slice %11 {offsets = [1, 0, 0], sizes = [1, 1, 64], strides = [1, 1, 1]} : vector<9x1x64xf32> to vector<1x1x64xf32>
    %31 = vector.shape_cast %30 : vector<1x1x64xf32> to vector<1x64xf32>
    %32 = vector.shape_cast %31 : vector<1x64xf32> to vector<1x1x64xf32>
    %33 = vector.broadcast %32 : vector<1x1x64xf32> to vector<8x16x64xf32>
    %34 = arith.mulf %29, %33 : vector<8x16x64xf32>
    %35 = arith.addf %28, %34 : vector<8x16x64xf32>
    %36 = vector.extract_strided_slice %21 {offsets = [0, 2, 0], sizes = [8, 16, 64], strides = [1, 1, 1]} : vector<8x18x64xf32> to vector<8x16x64xf32>
    %37 = vector.extract_strided_slice %11 {offsets = [2, 0, 0], sizes = [1, 1, 64], strides = [1, 1, 1]} : vector<9x1x64xf32> to vector<1x1x64xf32>
    %38 = vector.shape_cast %37 : vector<1x1x64xf32> to vector<1x64xf32>
    %39 = vector.shape_cast %38 : vector<1x64xf32> to vector<1x1x64xf32>
    %40 = vector.broadcast %39 : vector<1x1x64xf32> to vector<8x16x64xf32>
    %41 = arith.mulf %36, %40 : vector<8x16x64xf32>
    %42 = arith.addf %35, %41 : vector<8x16x64xf32>
    %c1_i32 = arith.constant 1 : i32
    %43 = arith.addi %17, %c1_i32 : i32
    %44 = arith.index_cast %43 : i32 to index
    %c0_32 = arith.constant 0 : index
    %c0_33 = arith.constant 0 : index
    %45 = vector.load %arg7[%44, %c0_32, %c0_33] : memref<18x18x64xf32, #tpu.memory_space<vmem>>, vector<8x18x64xf32>
    %46 = vector.extract_strided_slice %45 {offsets = [0, 0, 0], sizes = [8, 16, 64], strides = [1, 1, 1]} : vector<8x18x64xf32> to vector<8x16x64xf32>
    %47 = vector.extract_strided_slice %11 {offsets = [3, 0, 0], sizes = [1, 1, 64], strides = [1, 1, 1]} : vector<9x1x64xf32> to vector<1x1x64xf32>
    %48 = vector.shape_cast %47 : vector<1x1x64xf32> to vector<1x64xf32>
    %49 = vector.shape_cast %48 : vector<1x64xf32> to vector<1x1x64xf32>
    %50 = vector.broadcast %49 : vector<1x1x64xf32> to vector<8x16x64xf32>
    %51 = arith.mulf %46, %50 : vector<8x16x64xf32>
    %52 = arith.addf %42, %51 : vector<8x16x64xf32>
    %53 = vector.extract_strided_slice %45 {offsets = [0, 1, 0], sizes = [8, 16, 64], strides = [1, 1, 1]} : vector<8x18x64xf32> to vector<8x16x64xf32>
    %54 = vector.extract_strided_slice %11 {offsets = [4, 0, 0], sizes = [1, 1, 64], strides = [1, 1, 1]} : vector<9x1x64xf32> to vector<1x1x64xf32>
    %55 = vector.shape_cast %54 : vector<1x1x64xf32> to vector<1x64xf32>
    %56 = vector.shape_cast %55 : vector<1x64xf32> to vector<1x1x64xf32>
    %57 = vector.broadcast %56 : vector<1x1x64xf32> to vector<8x16x64xf32>
    %58 = arith.mulf %53, %57 : vector<8x16x64xf32>
    %59 = arith.addf %52, %58 : vector<8x16x64xf32>
    %60 = vector.extract_strided_slice %45 {offsets = [0, 2, 0], sizes = [8, 16, 64], strides = [1, 1, 1]} : vector<8x18x64xf32> to vector<8x16x64xf32>
    %61 = vector.extract_strided_slice %11 {offsets = [5, 0, 0], sizes = [1, 1, 64], strides = [1, 1, 1]} : vector<9x1x64xf32> to vector<1x1x64xf32>
    %62 = vector.shape_cast %61 : vector<1x1x64xf32> to vector<1x64xf32>
    %63 = vector.shape_cast %62 : vector<1x64xf32> to vector<1x1x64xf32>
    %64 = vector.broadcast %63 : vector<1x1x64xf32> to vector<8x16x64xf32>
    %65 = arith.mulf %60, %64 : vector<8x16x64xf32>
    %66 = arith.addf %59, %65 : vector<8x16x64xf32>
    %c2_i32 = arith.constant 2 : i32
    %67 = arith.addi %17, %c2_i32 : i32
    %68 = arith.index_cast %67 : i32 to index
    %c0_34 = arith.constant 0 : index
    %c0_35 = arith.constant 0 : index
    %69 = vector.load %arg7[%68, %c0_34, %c0_35] : memref<18x18x64xf32, #tpu.memory_space<vmem>>, vector<8x18x64xf32>
    %70 = vector.extract_strided_slice %69 {offsets = [0, 0, 0], sizes = [8, 16, 64], strides = [1, 1, 1]} : vector<8x18x64xf32> to vector<8x16x64xf32>
    %71 = vector.extract_strided_slice %11 {offsets = [6, 0, 0], sizes = [1, 1, 64], strides = [1, 1, 1]} : vector<9x1x64xf32> to vector<1x1x64xf32>
    %72 = vector.shape_cast %71 : vector<1x1x64xf32> to vector<1x64xf32>
    %73 = vector.shape_cast %72 : vector<1x64xf32> to vector<1x1x64xf32>
    %74 = vector.broadcast %73 : vector<1x1x64xf32> to vector<8x16x64xf32>
    %75 = arith.mulf %70, %74 : vector<8x16x64xf32>
    %76 = arith.addf %66, %75 : vector<8x16x64xf32>
    %77 = vector.extract_strided_slice %69 {offsets = [0, 1, 0], sizes = [8, 16, 64], strides = [1, 1, 1]} : vector<8x18x64xf32> to vector<8x16x64xf32>
    %78 = vector.extract_strided_slice %11 {offsets = [7, 0, 0], sizes = [1, 1, 64], strides = [1, 1, 1]} : vector<9x1x64xf32> to vector<1x1x64xf32>
    %79 = vector.shape_cast %78 : vector<1x1x64xf32> to vector<1x64xf32>
    %80 = vector.shape_cast %79 : vector<1x64xf32> to vector<1x1x64xf32>
    %81 = vector.broadcast %80 : vector<1x1x64xf32> to vector<8x16x64xf32>
    %82 = arith.mulf %77, %81 : vector<8x16x64xf32>
    %83 = arith.addf %76, %82 : vector<8x16x64xf32>
    %84 = vector.extract_strided_slice %69 {offsets = [0, 2, 0], sizes = [8, 16, 64], strides = [1, 1, 1]} : vector<8x18x64xf32> to vector<8x16x64xf32>
    %85 = vector.extract_strided_slice %11 {offsets = [8, 0, 0], sizes = [1, 1, 64], strides = [1, 1, 1]} : vector<9x1x64xf32> to vector<1x1x64xf32>
    %86 = vector.shape_cast %85 : vector<1x1x64xf32> to vector<1x64xf32>
    %87 = vector.shape_cast %86 : vector<1x64xf32> to vector<1x1x64xf32>
    %88 = vector.broadcast %87 : vector<1x1x64xf32> to vector<8x16x64xf32>
    %89 = arith.mulf %84, %88 : vector<8x16x64xf32>
    %90 = arith.addf %83, %89 : vector<8x16x64xf32>
    %91 = vector.shape_cast %12 : vector<1x64xf32> to vector<1x1x64xf32>
    %92 = vector.broadcast %91 : vector<1x1x64xf32> to vector<8x16x64xf32>
    %93 = arith.addf %90, %92 : vector<8x16x64xf32>
    %94 = vector.shape_cast %93 : vector<8x16x64xf32> to vector<128x64xf32>
    %95 = arith.truncf %94 : vector<128x64xf32> to vector<128x64xbf16>
    %cst_36 = arith.constant dense<0.000000e+00> : vector<128x128xf32>
    %96 = tpu.matmul %95, %14, %cst_36 {dimension_numbers = #tpu.dot_dimension_numbers<[1], [0], [0], [1], [0, 0, 1, 1], [], []>} : vector<128x64xbf16>, vector<64x128xbf16>, vector<128x128xf32> -> vector<128x128xf32>
    %97 = vector.broadcast %15 : vector<1x128xf32> to vector<128x128xf32>
    %98 = arith.addf %96, %97 : vector<128x128xf32>
    %99 = vector.shape_cast %98 : vector<128x128xf32> to vector<8x16x128xf32>
    %c0_37 = arith.constant 0 : index
    %100 = arith.index_cast %17 : i32 to index
    %c0_38 = arith.constant 0 : index
    %c0_39 = arith.constant 0 : index
    %101 = vector.load %arg6[%c0_37, %100, %c0_38, %c0_39] : memref<1x16x16x128xf32, #tpu.memory_space<vmem>>, vector<1x8x16x128xf32>
    %102 = vector.shape_cast %101 : vector<1x8x16x128xf32> to vector<8x16x128xf32>
    %103 = vector.shape_cast %99 : vector<8x16x128xf32> to vector<1x8x16x128xf32>
    tpu.vector_store %arg6[%c0_37, %100, %c0_38, %c0_39], %103 {strides = array<i32>} : memref<1x16x16x128xf32, #tpu.memory_space<vmem>>, vector<1x8x16x128xf32>,
    %c1_i32_40 = arith.constant 1 : i32
    %c8_i32_41 = arith.constant 8 : i32
    %104 = arith.muli %c1_i32_40, %c8_i32_41 : i32
    %105 = tpu.assume_multiple %104, 8 : i32
    %cst_42 = arith.constant 0.000000e+00 : f32
    %106 = vector.broadcast %cst_42 : f32 to vector<8x16x64xf32>
    %c0_i32_43 = arith.constant 0 : i32
    %107 = arith.addi %105, %c0_i32_43 : i32
    %108 = arith.index_cast %107 : i32 to index
    %c0_44 = arith.constant 0 : index
    %c0_45 = arith.constant 0 : index
    %109 = vector.load %arg7[%108, %c0_44, %c0_45] : memref<18x18x64xf32, #tpu.memory_space<vmem>>, vector<8x18x64xf32>
    %110 = vector.extract_strided_slice %109 {offsets = [0, 0, 0], sizes = [8, 16, 64], strides = [1, 1, 1]} : vector<8x18x64xf32> to vector<8x16x64xf32>
    %111 = vector.extract_strided_slice %11 {offsets = [0, 0, 0], sizes = [1, 1, 64], strides = [1, 1, 1]} : vector<9x1x64xf32> to vector<1x1x64xf32>
    %112 = vector.shape_cast %111 : vector<1x1x64xf32> to vector<1x64xf32>
    %113 = vector.shape_cast %112 : vector<1x64xf32> to vector<1x1x64xf32>
    %114 = vector.broadcast %113 : vector<1x1x64xf32> to vector<8x16x64xf32>
    %115 = arith.mulf %110, %114 : vector<8x16x64xf32>
    %116 = arith.addf %106, %115 : vector<8x16x64xf32>
    %117 = vector.extract_strided_slice %109 {offsets = [0, 1, 0], sizes = [8, 16, 64], strides = [1, 1, 1]} : vector<8x18x64xf32> to vector<8x16x64xf32>
    %118 = vector.extract_strided_slice %11 {offsets = [1, 0, 0], sizes = [1, 1, 64], strides = [1, 1, 1]} : vector<9x1x64xf32> to vector<1x1x64xf32>
    %119 = vector.shape_cast %118 : vector<1x1x64xf32> to vector<1x64xf32>
    %120 = vector.shape_cast %119 : vector<1x64xf32> to vector<1x1x64xf32>
    %121 = vector.broadcast %120 : vector<1x1x64xf32> to vector<8x16x64xf32>
    %122 = arith.mulf %117, %121 : vector<8x16x64xf32>
    %123 = arith.addf %116, %122 : vector<8x16x64xf32>
    %124 = vector.extract_strided_slice %109 {offsets = [0, 2, 0], sizes = [8, 16, 64], strides = [1, 1, 1]} : vector<8x18x64xf32> to vector<8x16x64xf32>
    %125 = vector.extract_strided_slice %11 {offsets = [2, 0, 0], sizes = [1, 1, 64], strides = [1, 1, 1]} : vector<9x1x64xf32> to vector<1x1x64xf32>
    %126 = vector.shape_cast %125 : vector<1x1x64xf32> to vector<1x64xf32>
    %127 = vector.shape_cast %126 : vector<1x64xf32> to vector<1x1x64xf32>
    %128 = vector.broadcast %127 : vector<1x1x64xf32> to vector<8x16x64xf32>
    %129 = arith.mulf %124, %128 : vector<8x16x64xf32>
    %130 = arith.addf %123, %129 : vector<8x16x64xf32>
    %c1_i32_46 = arith.constant 1 : i32
    %131 = arith.addi %105, %c1_i32_46 : i32
    %132 = arith.index_cast %131 : i32 to index
    %c0_47 = arith.constant 0 : index
    %c0_48 = arith.constant 0 : index
    %133 = vector.load %arg7[%132, %c0_47, %c0_48] : memref<18x18x64xf32, #tpu.memory_space<vmem>>, vector<8x18x64xf32>
    %134 = vector.extract_strided_slice %133 {offsets = [0, 0, 0], sizes = [8, 16, 64], strides = [1, 1, 1]} : vector<8x18x64xf32> to vector<8x16x64xf32>
    %135 = vector.extract_strided_slice %11 {offsets = [3, 0, 0], sizes = [1, 1, 64], strides = [1, 1, 1]} : vector<9x1x64xf32> to vector<1x1x64xf32>
    %136 = vector.shape_cast %135 : vector<1x1x64xf32> to vector<1x64xf32>
    %137 = vector.shape_cast %136 : vector<1x64xf32> to vector<1x1x64xf32>
    %138 = vector.broadcast %137 : vector<1x1x64xf32> to vector<8x16x64xf32>
    %139 = arith.mulf %134, %138 : vector<8x16x64xf32>
    %140 = arith.addf %130, %139 : vector<8x16x64xf32>
    %141 = vector.extract_strided_slice %133 {offsets = [0, 1, 0], sizes = [8, 16, 64], strides = [1, 1, 1]} : vector<8x18x64xf32> to vector<8x16x64xf32>
    %142 = vector.extract_strided_slice %11 {offsets = [4, 0, 0], sizes = [1, 1, 64], strides = [1, 1, 1]} : vector<9x1x64xf32> to vector<1x1x64xf32>
    %143 = vector.shape_cast %142 : vector<1x1x64xf32> to vector<1x64xf32>
    %144 = vector.shape_cast %143 : vector<1x64xf32> to vector<1x1x64xf32>
    %145 = vector.broadcast %144 : vector<1x1x64xf32> to vector<8x16x64xf32>
    %146 = arith.mulf %141, %145 : vector<8x16x64xf32>
    %147 = arith.addf %140, %146 : vector<8x16x64xf32>
    %148 = vector.extract_strided_slice %133 {offsets = [0, 2, 0], sizes = [8, 16, 64], strides = [1, 1, 1]} : vector<8x18x64xf32> to vector<8x16x64xf32>
    %149 = vector.extract_strided_slice %11 {offsets = [5, 0, 0], sizes = [1, 1, 64], strides = [1, 1, 1]} : vector<9x1x64xf32> to vector<1x1x64xf32>
    %150 = vector.shape_cast %149 : vector<1x1x64xf32> to vector<1x64xf32>
    %151 = vector.shape_cast %150 : vector<1x64xf32> to vector<1x1x64xf32>
    %152 = vector.broadcast %151 : vector<1x1x64xf32> to vector<8x16x64xf32>
    %153 = arith.mulf %148, %152 : vector<8x16x64xf32>
    %154 = arith.addf %147, %153 : vector<8x16x64xf32>
    %c2_i32_49 = arith.constant 2 : i32
    %155 = arith.addi %105, %c2_i32_49 : i32
    %156 = arith.index_cast %155 : i32 to index
    %c0_50 = arith.constant 0 : index
    %c0_51 = arith.constant 0 : index
    %157 = vector.load %arg7[%156, %c0_50, %c0_51] : memref<18x18x64xf32, #tpu.memory_space<vmem>>, vector<8x18x64xf32>
    %158 = vector.extract_strided_slice %157 {offsets = [0, 0, 0], sizes = [8, 16, 64], strides = [1, 1, 1]} : vector<8x18x64xf32> to vector<8x16x64xf32>
    %159 = vector.extract_strided_slice %11 {offsets = [6, 0, 0], sizes = [1, 1, 64], strides = [1, 1, 1]} : vector<9x1x64xf32> to vector<1x1x64xf32>
    %160 = vector.shape_cast %159 : vector<1x1x64xf32> to vector<1x64xf32>
    %161 = vector.shape_cast %160 : vector<1x64xf32> to vector<1x1x64xf32>
    %162 = vector.broadcast %161 : vector<1x1x64xf32> to vector<8x16x64xf32>
    %163 = arith.mulf %158, %162 : vector<8x16x64xf32>
    %164 = arith.addf %154, %163 : vector<8x16x64xf32>
    %165 = vector.extract_strided_slice %157 {offsets = [0, 1, 0], sizes = [8, 16, 64], strides = [1, 1, 1]} : vector<8x18x64xf32> to vector<8x16x64xf32>
    %166 = vector.extract_strided_slice %11 {offsets = [7, 0, 0], sizes = [1, 1, 64], strides = [1, 1, 1]} : vector<9x1x64xf32> to vector<1x1x64xf32>
    %167 = vector.shape_cast %166 : vector<1x1x64xf32> to vector<1x64xf32>
    %168 = vector.shape_cast %167 : vector<1x64xf32> to vector<1x1x64xf32>
    %169 = vector.broadcast %168 : vector<1x1x64xf32> to vector<8x16x64xf32>
    %170 = arith.mulf %165, %169 : vector<8x16x64xf32>
    %171 = arith.addf %164, %170 : vector<8x16x64xf32>
    %172 = vector.extract_strided_slice %157 {offsets = [0, 2, 0], sizes = [8, 16, 64], strides = [1, 1, 1]} : vector<8x18x64xf32> to vector<8x16x64xf32>
    %173 = vector.extract_strided_slice %11 {offsets = [8, 0, 0], sizes = [1, 1, 64], strides = [1, 1, 1]} : vector<9x1x64xf32> to vector<1x1x64xf32>
    %174 = vector.shape_cast %173 : vector<1x1x64xf32> to vector<1x64xf32>
    %175 = vector.shape_cast %174 : vector<1x64xf32> to vector<1x1x64xf32>
    %176 = vector.broadcast %175 : vector<1x1x64xf32> to vector<8x16x64xf32>
    %177 = arith.mulf %172, %176 : vector<8x16x64xf32>
    %178 = arith.addf %171, %177 : vector<8x16x64xf32>
    %179 = vector.shape_cast %12 : vector<1x64xf32> to vector<1x1x64xf32>
    %180 = vector.broadcast %179 : vector<1x1x64xf32> to vector<8x16x64xf32>
    %181 = arith.addf %178, %180 : vector<8x16x64xf32>
    %182 = vector.shape_cast %181 : vector<8x16x64xf32> to vector<128x64xf32>
    %183 = arith.truncf %182 : vector<128x64xf32> to vector<128x64xbf16>
    %cst_52 = arith.constant dense<0.000000e+00> : vector<128x128xf32>
    %184 = tpu.matmul %183, %14, %cst_52 {dimension_numbers = #tpu.dot_dimension_numbers<[1], [0], [0], [1], [0, 0, 1, 1], [], []>} : vector<128x64xbf16>, vector<64x128xbf16>, vector<128x128xf32> -> vector<128x128xf32>
    %185 = vector.broadcast %15 : vector<1x128xf32> to vector<128x128xf32>
    %186 = arith.addf %184, %185 : vector<128x128xf32>
    %187 = vector.shape_cast %186 : vector<128x128xf32> to vector<8x16x128xf32>
    %c0_53 = arith.constant 0 : index
    %188 = arith.index_cast %105 : i32 to index
    %c0_54 = arith.constant 0 : index
    %c0_55 = arith.constant 0 : index
    %189 = vector.load %arg6[%c0_53, %188, %c0_54, %c0_55] : memref<1x16x16x128xf32, #tpu.memory_space<vmem>>, vector<1x8x16x128xf32>
    %190 = vector.shape_cast %189 : vector<1x8x16x128xf32> to vector<8x16x128xf32>
    %191 = vector.shape_cast %187 : vector<8x16x128xf32> to vector<1x8x16x128xf32>
    tpu.vector_store %arg6[%c0_53, %188, %c0_54, %c0_55], %191 {strides = array<i32>} : memref<1x16x16x128xf32, #tpu.memory_space<vmem>>, vector<1x8x16x128xf32>,
    %c2_i32_56 = arith.constant 2 : i32
    return
  }
  func.func @transform_0(%arg0: i32) -> (i32, i32, i32, i32) {
    %c0_i32 = arith.constant 0 : i32
    %c0_i32_0 = arith.constant 0 : i32
    %c0_i32_1 = arith.constant 0 : i32
    %c0_i32_2 = arith.constant 0 : i32
    return %arg0, %c0_i32, %c0_i32_0, %c0_i32_1 : i32, i32, i32, i32
  }
  func.func @transform_1(%arg0: i32) -> (i32, i32, i32) {
    %c0_i32 = arith.constant 0 : i32
    %c0_i32_0 = arith.constant 0 : i32
    %c0_i32_1 = arith.constant 0 : i32
    %c0_i32_2 = arith.constant 0 : i32
    return %c0_i32, %c0_i32_0, %c0_i32_1 : i32, i32, i32
  }
  func.func @transform_2(%arg0: i32) -> (i32, i32) {
    %c0_i32 = arith.constant 0 : i32
    %c0_i32_0 = arith.constant 0 : i32
    %c0_i32_1 = arith.constant 0 : i32
    return %c0_i32, %c0_i32_0 : i32, i32
  }
  func.func @transform_3(%arg0: i32) -> (i32, i32) {
    %c0_i32 = arith.constant 0 : i32
    %c0_i32_0 = arith.constant 0 : i32
    %c0_i32_1 = arith.constant 0 : i32
    return %c0_i32, %c0_i32_0 : i32, i32
  }
  func.func @transform_4(%arg0: i32) -> (i32, i32) {
    %c0_i32 = arith.constant 0 : i32
    %c0_i32_0 = arith.constant 0 : i32
    %c0_i32_1 = arith.constant 0 : i32
    return %c0_i32, %c0_i32_0 : i32, i32
  }
  func.func @transform_5(%arg0: i32) -> (i32, i32, i32, i32) {
    %c0_i32 = arith.constant 0 : i32
    %c0_i32_0 = arith.constant 0 : i32
    %c0_i32_1 = arith.constant 0 : i32
    %c0_i32_2 = arith.constant 0 : i32
    return %arg0, %c0_i32, %c0_i32_0, %c0_i32_1 : i32, i32, i32, i32
  }
}

</mosaic_0001>

<llo_original>
// kernel: depthwise_separable_conv2d.1
$region0: #{depthwise_separable_conv2d.1}
  #allocation0 [shape = 'u32[]', space=smem, size = 0x4, offset = 0x4, fixed_abs, tag = 'smem constant byte address 0x4 - core index']
  #allocation1 [shape = 'u32[144,128]{1,0:T(1,128)}', space=vmem, size = 0x12000, scoped, tag = 'internal scratch']
  #allocation2 [shape = 'f32[18,18,64]{2,1,0:T(8,128)}', space=vmem, size = 0x36000, scoped, tag = 'scratch operand']
  %s0 = inlined_call_operand.hbm [shape: f32[2,16,16,64], index: 0, kind: input, shape index: {}]
  %s1 = inlined_call_operand.vmem [shape: f32[9,1,64], index: 1, kind: input, shape index: {}]
  %s2 = inlined_call_operand.vmem [shape: f32[1,64], index: 2, kind: input, shape index: {}]
  %s3 = inlined_call_operand.vmem [shape: f32[64,128], index: 3, kind: input, shape index: {}]
  %s4 = inlined_call_operand.vmem [shape: f32[1,128], index: 4, kind: input, shape index: {}]
  %s5 = inlined_call_operand.hbm [shape: f32[2,16,16,128], index: 5, kind: output, shape index: {}]
  %s6 = sld [smem:[#allocation0]]
  $region57: #{depthwise_separable_conv2d.1} parent=0
    _
  %s8 = ssub.s32 1, %s6
  %s9 = scalar_select 0, %s8, %s6
  $region1: #{depthwise_separable_conv2d.1} parent=0
    #allocation3 [shape = 'u8[262144]{0}', space=vmem, size = 0x40000, scoped, tag = 'input window, operand 0']
    #allocation4 [shape = 's32[2]{0}', space=sflag, size = 0x8, scoped, tag = 'scoped memory for depthwise_separable_conv2d.1']
    #allocation5 [shape = 's32[2]{0}', space=sflag, size = 0x8, scoped, tag = 'scoped memory for depthwise_separable_conv2d.1']
    #allocation6 [shape = 'u8[262144]{0}', space=vmem, size = 0x40000, scoped, tag = 'output window, operand 0']
    %10 = vsyncpa [#allocation4], 0
    %s11 = scalar_lea.sflag [#allocation4], 1
    %12 = vsyncpa %s11, 0
    %13 = vsyncpa [#allocation5], 0
    %s14 = scalar_lea.sflag [#allocation5], 1
    %15 = vsyncpa %s14, 0
    loop: start=0, step=1, limit=4
    $region2: #{depthwise_separable_conv2d.1} parent=1 // loop_pre_header
      _
    $region3: #{depthwise_separable_conv2d.1} parent=1 // loop_header
      %s17 = sphi 0, %s21
      %p18 = scmp.ge.s32.totalorder %s17, 4
      %s27 = sphi 0, %s29
      %s30 = sphi 0, %s27
      %s31 = sphi 0, %s30
      %s47 = sphi 0, %s31
      %s51 = sphi 0, %s51
      %s53 = sphi 0, %s51
      %s54 = sphi 0, %s53
      %s68 = sphi 0, %s54
      %s72 = sphi 0, %s72
      %s74 = sphi 0, %s72
      %s75 = sphi 0, %s74
      %s89 = sphi 0, %s75
      %s93 = sphi 0, %s93
      %s95 = sphi 0, %s93
      %s96 = sphi 0, %s95
      %s110 = sphi 0, %s96
      %s114 = sphi 0, %s114
      %s116 = sphi 0, %s114
      %s117 = sphi 0, %s116
      %s131 = sphi 0, %s117
      %s137 = sphi 0, %s139
      %s140 = sphi 0, %s137
      %s141 = sphi 0, %s140
      %s157 = sphi 0, %s141
    $region4: #{depthwise_separable_conv2d.1} parent=1 // loop_header_branch
      %20 = sbr.rel (%p18) target = $region8
    $region5: #{depthwise_separable_conv2d.1} parent=1 // loop_body
      %s22 = ssub.s32 %s17, 1
      %s23 = ssub.s32 %s17, 2
      %s24 = sadd.s32 %s17, 1
      %s25 = ssub.s32 %s17, %s24
      %p26 = scmp.eq.s32.totalorder %s25, 0
      %s28 = sadd.s32 %s27, 1
      %s29 = scalar_select %p26, %s27, %s28
      %p32 = pneg %p26
      %p33 = scmp.eq.s32.totalorder %s17, 1
      %p34 = por %p32, %p33
      %p35 = scmp.ne.s32.totalorder %s27, %s30
      %p36 = scmp.eq.s32.totalorder %s17, 0
      %p37 = por %p35, %p36
      %p38 = scmp.ne.s32.totalorder %s27, %s30
      %p39 = scmp.eq.s32.totalorder %s22, 1
      %p40 = por %p38, %p39
      %p41 = scmp.ne.s32.totalorder %s30, %s31
      %p42 = scmp.eq.s32.totalorder %s22, 0
      %p43 = por %p41, %p42
      %p44 = scmp.ne.s32.totalorder %s30, %s31
      %p45 = scmp.eq.s32.totalorder %s23, 1
      %p46 = por %p44, %p45
      %p48 = scmp.ne.s32.totalorder %s31, %s47
      %p49 = scmp.eq.s32.totalorder %s23, 0
      %p50 = por %p48, %p49
      %s52 = sadd.s32 %s51, 1
      %p55 = scmp.eq.s32.totalorder %s17, 1
      %p56 = scmp.ne.s32.totalorder %s51, %s53
      %p57 = scmp.eq.s32.totalorder %s17, 0
      %p58 = por %p56, %p57
      %p59 = scmp.ne.s32.totalorder %s51, %s53
      %p60 = scmp.eq.s32.totalorder %s22, 1
      %p61 = por %p59, %p60
      %p62 = scmp.ne.s32.totalorder %s53, %s54
      %p63 = scmp.eq.s32.totalorder %s22, 0
      %p64 = por %p62, %p63
      %p65 = scmp.ne.s32.totalorder %s53, %s54
      %p66 = scmp.eq.s32.totalorder %s23, 1
      %p67 = por %p65, %p66
      %p69 = scmp.ne.s32.totalorder %s54, %s68
      %p70 = scmp.eq.s32.totalorder %s23, 0
      %p71 = por %p69, %p70
      %s73 = sadd.s32 %s72, 1
      %p76 = scmp.eq.s32.totalorder %s17, 1
      %p77 = scmp.ne.s32.totalorder %s72, %s74
      %p78 = scmp.eq.s32.totalorder %s17, 0
      %p79 = por %p77, %p78
      %p80 = scmp.ne.s32.totalorder %s72, %s74
      %p81 = scmp.eq.s32.totalorder %s22, 1
      %p82 = por %p80, %p81
      %p83 = scmp.ne.s32.totalorder %s74, %s75
      %p84 = scmp.eq.s32.totalorder %s22, 0
      %p85 = por %p83, %p84
      %p86 = scmp.ne.s32.totalorder %s74, %s75
      %p87 = scmp.eq.s32.totalorder %s23, 1
      %p88 = por %p86, %p87
      %p90 = scmp.ne.s32.totalorder %s75, %s89
      %p91 = scmp.eq.s32.totalorder %s23, 0
      %p92 = por %p90, %p91
      %s94 = sadd.s32 %s93, 1
      %p97 = scmp.eq.s32.totalorder %s17, 1
      %p98 = scmp.ne.s32.totalorder %s93, %s95
      %p99 = scmp.eq.s32.totalorder %s17, 0
      %p100 = por %p98, %p99
      %p101 = scmp.ne.s32.totalorder %s93, %s95
      %p102 = scmp.eq.s32.totalorder %s22, 1
      %p103 = por %p101, %p102
      %p104 = scmp.ne.s32.totalorder %s95, %s96
      %p105 = scmp.eq.s32.totalorder %s22, 0
      %p106 = por %p104, %p105
      %p107 = scmp.ne.s32.totalorder %s95, %s96
      %p108 = scmp.eq.s32.totalorder %s23, 1
      %p109 = por %p107, %p108
      %p111 = scmp.ne.s32.totalorder %s96, %s110
      %p112 = scmp.eq.s32.totalorder %s23, 0
      %p113 = por %p111, %p112
      %s115 = sadd.s32 %s114, 1
      %p118 = scmp.eq.s32.totalorder %s17, 1
      %p119 = scmp.ne.s32.totalorder %s114, %s116
      %p120 = scmp.eq.s32.totalorder %s17, 0
      %p121 = por %p119, %p120
      %p122 = scmp.ne.s32.totalorder %s114, %s116
      %p123 = scmp.eq.s32.totalorder %s22, 1
      %p124 = por %p122, %p123
      %p125 = scmp.ne.s32.totalorder %s116, %s117
      %p126 = scmp.eq.s32.totalorder %s22, 0
      %p127 = por %p125, %p126
      %p128 = scmp.ne.s32.totalorder %s116, %s117
      %p129 = scmp.eq.s32.totalorder %s23, 1
      %p130 = por %p128, %p129
      %p132 = scmp.ne.s32.totalorder %s117, %s131
      %p133 = scmp.eq.s32.totalorder %s23, 0
      %p134 = por %p132, %p133
      %s135 = ssub.s32 %s17, %s24
      %p136 = scmp.eq.s32.totalorder %s135, 0
      %s138 = sadd.s32 %s137, 1
      %s139 = scalar_select %p136, %s137, %s138
      %p142 = pneg %p136
      %p143 = scmp.eq.s32.totalorder %s17, 1
      %p144 = por %p142, %p143
      %p145 = scmp.ne.s32.totalorder %s137, %s140
      %p146 = scmp.eq.s32.totalorder %s17, 0
      %p147 = por %p145, %p146
      %p148 = scmp.ne.s32.totalorder %s137, %s140
      %p149 = scmp.eq.s32.totalorder %s22, 1
      %p150 = por %p148, %p149
      %p151 = scmp.ne.s32.totalorder %s140, %s141
      %p152 = scmp.eq.s32.totalorder %s22, 0
      %p153 = por %p151, %p152
      %p154 = scmp.ne.s32.totalorder %s140, %s141
      %p155 = scmp.eq.s32.totalorder %s23, 1
      %p156 = por %p154, %p155
      %p158 = scmp.ne.s32.totalorder %s141, %s157
      %p159 = scmp.eq.s32.totalorder %s23, 0
      %p160 = por %p158, %p159
      %p161 = scmp.le.s32.totalorder 1, %s17
      %p162 = scmp.lt.s32.totalorder %s17, 3
      %p163 = pnand %p161, %p162
      %p164 = pneg %p163
      // Predicated region
      $region9: #{depthwise_separable_conv2d.1} parent=5 // pred_check
        _
      $region10: #{depthwise_separable_conv2d.1} parent=5 // pred_check_branch
        %166 = sbr.rel (%p163) target = $region12
      $region11: #{depthwise_separable_conv2d.1} parent=5 // pred_region
        %s167 = ssub.s32 %s17, 1
        // Predicated region
        $region13: #{depthwise_separable_conv2d.1} parent=11 // pred_check
          %p168 = pneg %p64
        $region14: #{depthwise_separable_conv2d.1} parent=11 // pred_check_branch
          %170 = sbr.rel (%p168) target = $region16
        $region15: #{depthwise_separable_conv2d.1} parent=11 // pred_region
          _
        $region16: #{depthwise_separable_conv2d.1} parent=11 // pred_fallthru
          _
        // Predicated region
        $region17: #{depthwise_separable_conv2d.1} parent=11 // pred_check
          %p171 = pneg %p85
        $region18: #{depthwise_separable_conv2d.1} parent=11 // pred_check_branch
          %173 = sbr.rel (%p171) target = $region20
        $region19: #{depthwise_separable_conv2d.1} parent=11 // pred_region
          _
        $region20: #{depthwise_separable_conv2d.1} parent=11 // pred_fallthru
          _
        // Predicated region
        $region21: #{depthwise_separable_conv2d.1} parent=11 // pred_check
          %p174 = pneg %p106
        $region22: #{depthwise_separable_conv2d.1} parent=11 // pred_check_branch
          %176 = sbr.rel (%p174) target = $region24
        $region23: #{depthwise_separable_conv2d.1} parent=11 // pred_region
          _
        $region24: #{depthwise_separable_conv2d.1} parent=11 // pred_fallthru
          _
        // Predicated region
        $region25: #{depthwise_separable_conv2d.1} parent=11 // pred_check
          %p177 = pneg %p127
        $region26: #{depthwise_separable_conv2d.1} parent=11 // pred_check_branch
          %179 = sbr.rel (%p177) target = $region28
        $region27: #{depthwise_separable_conv2d.1} parent=11 // pred_region
          _
        $region28: #{depthwise_separable_conv2d.1} parent=11 // pred_fallthru
          _
      $region12: #{depthwise_separable_conv2d.1} parent=5 // pred_fallthru
        _
      %p180 = scmp.lt.s32.totalorder %s17, 2
      // Predicated region
      $region29: #{depthwise_separable_conv2d.1} parent=5 // pred_check
        %p181 = pneg %p180
      $region30: #{depthwise_separable_conv2d.1} parent=5 // pred_check_branch
        %183 = sbr.rel (%p181) target = $region32
      $region31: #{depthwise_separable_conv2d.1} parent=5 // pred_region
        // Predicated region
        $region33: #{depthwise_separable_conv2d.1} parent=31 // pred_check
          %p184 = pneg %p37
        $region34: #{depthwise_separable_conv2d.1} parent=31 // pred_check_branch
          %186 = sbr.rel (%p184) target = $region36
        $region35: #{depthwise_separable_conv2d.1} parent=31 // pred_region
          %s187 = sand.u32 %s27, 1
          %s188 = scalar_lea.sflag [#allocation4], %s187
          %s189 = sand.u32 %s27, 1
          %s190 = smul.addr %s189, 256
          %s191 = scalar_lea.vmem [#allocation3], %s190
          %s193 = ssub.s32 4096, 4096
          %194 = vsyncadd %s188, %s193
          %s195 = smul.addr %s17, 32
          %s196 = smul.addr %s195, 128
          %s197 = scalar_lea.hbm %s0, %s196
          %s198 = sshll.u32 %s191, 4
          %s199 = int_to_ptr.vmem [resolvable:$true] %s198
          %204 = dma.hbm_to_vmem [thread:$0]  %s197, 4096, %s199, %s188, 128, 128, 8
        $region36: #{depthwise_separable_conv2d.1} parent=31 // pred_fallthru
          _
      $region32: #{depthwise_separable_conv2d.1} parent=5 // pred_fallthru
        _
      %p205 = scmp.le.s32.totalorder 1, %s17
      %p206 = scmp.lt.s32.totalorder %s17, 3
      %p207 = pnand %p205, %p206
      %p208 = pneg %p207
      // Predicated region
      $region37: #{depthwise_separable_conv2d.1} parent=5 // pred_check
        _
      $region38: #{depthwise_separable_conv2d.1} parent=5 // pred_check_branch
        %210 = sbr.rel (%p207) target = $region40
      $region39: #{depthwise_separable_conv2d.1} parent=5 // pred_region
        %s211 = ssub.s32 %s17, 1
        %s212 = sand.u32 %s30, 1
        %s213 = scalar_lea.sflag [#allocation4], %s212
        %s214 = sand.u32 %s30, 1
        %s215 = smul.addr %s214, 256
        %s216 = scalar_lea.vmem [#allocation3], %s215
        // Predicated region
        $region41: #{depthwise_separable_conv2d.1} parent=39 // pred_check
          %p217 = pneg %p43
        $region42: #{depthwise_separable_conv2d.1} parent=39 // pred_check_branch
          %219 = sbr.rel (%p217) target = $region44
        $region43: #{depthwise_separable_conv2d.1} parent=39 // pred_region
          %220 = dma.done %s213, 4096
        $region44: #{depthwise_separable_conv2d.1} parent=39 // pred_fallthru
          _
        %s221 = sand.u32 %s30, 1
        %s222 = scalar_lea.sflag [#allocation4], %s221
        %s223 = sand.u32 %s30, 1
        %s224 = smul.addr %s223, 256
        %s225 = scalar_lea.vmem [#allocation3], %s224
        %p226 = pneg %p43
        %p227 = pneg %p40
        %p228 = pneg %p64
        %p229 = pneg %p61
        %p230 = pneg %p85
        %p231 = pneg %p82
        %p232 = pneg %p106
        %p233 = pneg %p103
        %p234 = pneg %p127
        %p235 = pneg %p124
        %p236 = pneg %p153
        %p237 = pneg %p150
        %s238 = sand.u32 %s140, 1
        %s239 = scalar_lea.sflag [#allocation5], %s238
        %s240 = sand.u32 %s140, 1
        %s241 = smul.addr %s240, 256
        %s242 = scalar_lea.vmem [#allocation6], %s241
        %vm244 = vcmask 523264
        %245 = vst.msk [vmem:[#allocation2] sm:$0xff] %vm244, 0.0
        %246 = vst.msk [vmem:[#allocation2 + $0x8] sm:$0xff] %vm244, 0.0
        %vm247 = vcmask 517120
        %248 = vst.msk [vmem:[#allocation2 + $0x10] sm:$0x3] %vm247, 0.0
        %s249 = scalar_lea.vmem [#allocation2], 408
        %250 = vst.msk [vmem:[%s249] sm:$0xff] %vm244, 0.0
        %251 = vst.msk [vmem:[%s249 + $0x8] sm:$0xff] %vm244, 0.0
        %252 = vst.msk [vmem:[%s249 + $0x10] sm:$0x3] %vm247, 0.0
        %s253 = scalar_lea.vmem [#allocation2], 24
        %vm254 = vcmask 516096
        %255 = vst.msk [vmem:[%s253] sm:$0x1] %vm254, 0.0
        %256 = vst.msk [vmem:[%s253 + $0x18] sm:$0x1] %vm254, 0.0
        %257 = vst.msk [vmem:[%s253 + $0x30] sm:$0x1] %vm254, 0.0
        %258 = vst.msk [vmem:[%s253 + $0x48] sm:$0x1] %vm254, 0.0
        %259 = vst.msk [vmem:[%s253 + $0x60] sm:$0x1] %vm254, 0.0
        %260 = vst.msk [vmem:[%s253 + $0x78] sm:$0x1] %vm254, 0.0
        %261 = vst.msk [vmem:[%s253 + $0x90] sm:$0x1] %vm254, 0.0
        %262 = vst.msk [vmem:[%s253 + $0xa8] sm:$0x1] %vm254, 0.0
        %263 = vst.msk [vmem:[%s253 + $0xc0] sm:$0x1] %vm254, 0.0
        %264 = vst.msk [vmem:[%s253 + $0xd8] sm:$0x1] %vm254, 0.0
        %265 = vst.msk [vmem:[%s253 + $0xf0] sm:$0x1] %vm254, 0.0
        %266 = vst.msk [vmem:[%s253 + $0x108] sm:$0x1] %vm254, 0.0
        %267 = vst.msk [vmem:[%s253 + $0x120] sm:$0x1] %vm254, 0.0
        %268 = vst.msk [vmem:[%s253 + $0x138] sm:$0x1] %vm254, 0.0
        %269 = vst.msk [vmem:[%s253 + $0x150] sm:$0x1] %vm254, 0.0
        %270 = vst.msk [vmem:[%s253 + $0x168] sm:$0x1] %vm254, 0.0
        %271 = vst.msk [vmem:[%s253 + $0x11] sm:$0x1] %vm254, 0.0
        %272 = vst.msk [vmem:[%s253 + $0x29] sm:$0x1] %vm254, 0.0
        %273 = vst.msk [vmem:[%s253 + $0x41] sm:$0x1] %vm254, 0.0
        %274 = vst.msk [vmem:[%s253 + $0x59] sm:$0x1] %vm254, 0.0
        %275 = vst.msk [vmem:[%s253 + $0x71] sm:$0x1] %vm254, 0.0
        %276 = vst.msk [vmem:[%s253 + $0x89] sm:$0x1] %vm254, 0.0
        %277 = vst.msk [vmem:[%s253 + $0xa1] sm:$0x1] %vm254, 0.0
        %278 = vst.msk [vmem:[%s253 + $0xb9] sm:$0x1] %vm254, 0.0
        %279 = vst.msk [vmem:[%s253 + $0xd1] sm:$0x1] %vm254, 0.0
        %280 = vst.msk [vmem:[%s253 + $0xe9] sm:$0x1] %vm254, 0.0
        %281 = vst.msk [vmem:[%s253 + $0x101] sm:$0x1] %vm254, 0.0
        %282 = vst.msk [vmem:[%s253 + $0x119] sm:$0x1] %vm254, 0.0
        %283 = vst.msk [vmem:[%s253 + $0x131] sm:$0x1] %vm254, 0.0
        %284 = vst.msk [vmem:[%s253 + $0x149] sm:$0x1] %vm254, 0.0
        %285 = vst.msk [vmem:[%s253 + $0x161] sm:$0x1] %vm254, 0.0
        %286 = vst.msk [vmem:[%s253 + $0x179] sm:$0x1] %vm254, 0.0
        %v287 = vld [vmem:[%s216] sm:$0xff]
        %v288 = vld [vmem:[%s216 + $0x8] sm:$0xff]
        %v289 = vld [vmem:[%s216 + $0x10] sm:$0xff]
        %v290 = vld [vmem:[%s216 + $0x18] sm:$0xff]
        %v291 = vld [vmem:[%s216 + $0x20] sm:$0xff]
        %v292 = vld [vmem:[%s216 + $0x28] sm:$0xff]
        %v293 = vld [vmem:[%s216 + $0x30] sm:$0xff]
        %v294 = vld [vmem:[%s216 + $0x38] sm:$0xff]
        %v295 = vld [vmem:[%s216 + $0x40] sm:$0xff]
        %v296 = vld [vmem:[%s216 + $0x48] sm:$0xff]
        %v297 = vld [vmem:[%s216 + $0x50] sm:$0xff]
        %v298 = vld [vmem:[%s216 + $0x58] sm:$0xff]
        %v299 = vld [vmem:[%s216 + $0x60] sm:$0xff]
        %v300 = vld [vmem:[%s216 + $0x68] sm:$0xff]
        %v301 = vld [vmem:[%s216 + $0x70] sm:$0xff]
        %v302 = vld [vmem:[%s216 + $0x78] sm:$0xff]
        %v303 = vld [vmem:[%s216 + $0x80] sm:$0xff]
        %v304 = vld [vmem:[%s216 + $0x88] sm:$0xff]
        %v305 = vld [vmem:[%s216 + $0x90] sm:$0xff]
        %v306 = vld [vmem:[%s216 + $0x98] sm:$0xff]
        %v307 = vld [vmem:[%s216 + $0xa0] sm:$0xff]
        %v308 = vld [vmem:[%s216 + $0xa8] sm:$0xff]
        %v309 = vld [vmem:[%s216 + $0xb0] sm:$0xff]
        %v310 = vld [vmem:[%s216 + $0xb8] sm:$0xff]
        %v311 = vld [vmem:[%s216 + $0xc0] sm:$0xff]
        %v312 = vld [vmem:[%s216 + $0xc8] sm:$0xff]
        %v313 = vld [vmem:[%s216 + $0xd0] sm:$0xff]
        %v314 = vld [vmem:[%s216 + $0xd8] sm:$0xff]
        %v315 = vld [vmem:[%s216 + $0xe0] sm:$0xff]
        %v316 = vld [vmem:[%s216 + $0xe8] sm:$0xff]
        %v317 = vld [vmem:[%s216 + $0xf0] sm:$0xff]
        %v318 = vld [vmem:[%s216 + $0xf8] sm:$0xff]
        %319 = vst.msk [vmem:[%s253 + $0x1] sm:$0xff] %vm244, %v287
        %320 = vst.msk [vmem:[%s253 + $0x9] sm:$0xff] %vm244, %v288
        %321 = vst.msk [vmem:[%s253 + $0x19] sm:$0xff] %vm244, %v289
        %322 = vst.msk [vmem:[%s253 + $0x21] sm:$0xff] %vm244, %v290
        %323 = vst.msk [vmem:[%s253 + $0x31] sm:$0xff] %vm244, %v291
        %324 = vst.msk [vmem:[%s253 + $0x39] sm:$0xff] %vm244, %v292
        %325 = vst.msk [vmem:[%s253 + $0x49] sm:$0xff] %vm244, %v293
        %326 = vst.msk [vmem:[%s253 + $0x51] sm:$0xff] %vm244, %v294
        %327 = vst.msk [vmem:[%s253 + $0x61] sm:$0xff] %vm244, %v295
        %328 = vst.msk [vmem:[%s253 + $0x69] sm:$0xff] %vm244, %v296
        %329 = vst.msk [vmem:[%s253 + $0x79] sm:$0xff] %vm244, %v297
        %330 = vst.msk [vmem:[%s253 + $0x81] sm:$0xff] %vm244, %v298
        %331 = vst.msk [vmem:[%s253 + $0x91] sm:$0xff] %vm244, %v299
        %332 = vst.msk [vmem:[%s253 + $0x99] sm:$0xff] %vm244, %v300
        %333 = vst.msk [vmem:[%s253 + $0xa9] sm:$0xff] %vm244, %v301
        %334 = vst.msk [vmem:[%s253 + $0xb1] sm:$0xff] %vm244, %v302
        %335 = vst.msk [vmem:[%s253 + $0xc1] sm:$0xff] %vm244, %v303
        %336 = vst.msk [vmem:[%s253 + $0xc9] sm:$0xff] %vm244, %v304
        %337 = vst.msk [vmem:[%s253 + $0xd9] sm:$0xff] %vm244, %v305
        %338 = vst.msk [vmem:[%s253 + $0xe1] sm:$0xff] %vm244, %v306
        %339 = vst.msk [vmem:[%s253 + $0xf1] sm:$0xff] %vm244, %v307
        %340 = vst.msk [vmem:[%s253 + $0xf9] sm:$0xff] %vm244, %v308
        %341 = vst.msk [vmem:[%s253 + $0x109] sm:$0xff] %vm244, %v309
        %342 = vst.msk [vmem:[%s253 + $0x111] sm:$0xff] %vm244, %v310
        %343 = vst.msk [vmem:[%s253 + $0x121] sm:$0xff] %vm244, %v311
        %344 = vst.msk [vmem:[%s253 + $0x129] sm:$0xff] %vm244, %v312
        %345 = vst.msk [vmem:[%s253 + $0x139] sm:$0xff] %vm244, %v313
        %346 = vst.msk [vmem:[%s253 + $0x141] sm:$0xff] %vm244, %v314
        %347 = vst.msk [vmem:[%s253 + $0x151] sm:$0xff] %vm244, %v315
        %348 = vst.msk [vmem:[%s253 + $0x159] sm:$0xff] %vm244, %v316
        %349 = vst.msk [vmem:[%s253 + $0x169] sm:$0xff] %vm244, %v317
        %350 = vst.msk [vmem:[%s253 + $0x171] sm:$0xff] %vm244, %v318
        %v351 = vld [vmem:[%s1] sm:$0x1]
        %v352 = vld [vmem:[%s1 + $0x1] sm:$0x1]
        %v353 = vld [vmem:[%s1 + $0x2] sm:$0x1]
        %v354 = vld [vmem:[%s1 + $0x3] sm:$0x1]
        %v355 = vld [vmem:[%s1 + $0x4] sm:$0x1]
        %v356 = vld [vmem:[%s1 + $0x5] sm:$0x1]
        %v357 = vld [vmem:[%s1 + $0x6] sm:$0x1]
        %v358 = vld [vmem:[%s1 + $0x7] sm:$0x1]
        %v359 = vld [vmem:[%s1 + $0x8] sm:$0x1]
        %v360 = vld [vmem:[%s2] sm:$0x1]
        %v361 = vld [vmem:[%s3] sm:$0xff]
        %v362 = vld [vmem:[%s3 + $0x8] sm:$0xff]
        %v363 = vld [vmem:[%s3 + $0x10] sm:$0xff]
        %v364 = vld [vmem:[%s3 + $0x18] sm:$0xff]
        %v365 = vld [vmem:[%s3 + $0x20] sm:$0xff]
        %v366 = vld [vmem:[%s3 + $0x28] sm:$0xff]
        %v367 = vld [vmem:[%s3 + $0x30] sm:$0xff]
        %v368 = vld [vmem:[%s3 + $0x38] sm:$0xff]
        %v369 = vpack.c.bf16 %v362, %v361
        %v370 = vpack.c.bf16 %v364, %v363
        %v371 = vpack.c.bf16 %v366, %v365
        %v372 = vpack.c.bf16 %v368, %v367
        %v373 = vld [vmem:[%s4] sm:$0x1]
        %s374 = smul.u32 0, 24
        %s375 = scalar_lea.vmem [#allocation2], %s374
        %v376 = vld [vmem:[%s375] sm:$0xff]
        %v377 = vld [vmem:[%s375 + $0x8] sm:$0xff]
        %v378 = vld [vmem:[%s375 + $0x10] sm:$0x3]
        %v379 = vld [vmem:[%s375 + $0x18] sm:$0xff]
        %v380 = vld [vmem:[%s375 + $0x20] sm:$0xff]
        %v381 = vld [vmem:[%s375 + $0x28] sm:$0x3]
        %v382 = vld [vmem:[%s375 + $0x30] sm:$0xff]
        %v383 = vld [vmem:[%s375 + $0x38] sm:$0xff]
        %v384 = vld [vmem:[%s375 + $0x40] sm:$0x3]
        %v385 = vld [vmem:[%s375 + $0x48] sm:$0xff]
        %v386 = vld [vmem:[%s375 + $0x50] sm:$0xff]
        %v387 = vld [vmem:[%s375 + $0x58] sm:$0x3]
        %v388 = vld [vmem:[%s375 + $0x60] sm:$0xff]
        %v389 = vld [vmem:[%s375 + $0x68] sm:$0xff]
        %v390 = vld [vmem:[%s375 + $0x70] sm:$0x3]
        %v391 = vld [vmem:[%s375 + $0x78] sm:$0xff]
        %v392 = vld [vmem:[%s375 + $0x80] sm:$0xff]
        %v393 = vld [vmem:[%s375 + $0x88] sm:$0x3]
        %v394 = vld [vmem:[%s375 + $0x90] sm:$0xff]
        %v395 = vld [vmem:[%s375 + $0x98] sm:$0xff]
        %v396 = vld [vmem:[%s375 + $0xa0] sm:$0x3]
        %v397 = vld [vmem:[%s375 + $0xa8] sm:$0xff]
        %v398 = vld [vmem:[%s375 + $0xb0] sm:$0xff]
        %v399 = vld [vmem:[%s375 + $0xb8] sm:$0x3]
        %v401 = vlaneseq
        %v402 = vshrl.u32 %v401, 7
        %v403 = vsub.s32 0, %v402
        %v404 = vrot.slane %v351, %v403
        %v406 = vmul.f32 %v376, %v404
        %v407 = vmul.f32 %v377, %v404
        %v408 = vmul.f32 %v379, %v404
        %v409 = vmul.f32 %v380, %v404
        %v410 = vmul.f32 %v382, %v404
        %v411 = vmul.f32 %v383, %v404
        %v412 = vmul.f32 %v385, %v404
        %v413 = vmul.f32 %v386, %v404
        %v414 = vmul.f32 %v388, %v404
        %v415 = vmul.f32 %v389, %v404
        %v416 = vmul.f32 %v391, %v404
        %v417 = vmul.f32 %v392, %v404
        %v418 = vmul.f32 %v394, %v404
        %v419 = vmul.f32 %v395, %v404
        %v420 = vmul.f32 %v397, %v404
        %v421 = vmul.f32 %v398, %v404
        %v422 = vadd.f32 %v406, 0.0
        %v423 = vadd.f32 %v407, 0.0
        %v424 = vadd.f32 %v408, 0.0
        %v425 = vadd.f32 %v409, 0.0
        %v426 = vadd.f32 %v410, 0.0
        %v427 = vadd.f32 %v411, 0.0
        %v428 = vadd.f32 %v412, 0.0
        %v429 = vadd.f32 %v413, 0.0
        %v430 = vadd.f32 %v414, 0.0
        %v431 = vadd.f32 %v415, 0.0
        %v432 = vadd.f32 %v416, 0.0
        %v433 = vadd.f32 %v417, 0.0
        %v434 = vadd.f32 %v418, 0.0
        %v435 = vadd.f32 %v419, 0.0
        %v436 = vadd.f32 %v420, 0.0
        %v437 = vadd.f32 %v421, 0.0
        %v439 = vlaneseq
        %v440 = vshrl.u32 %v439, 7
        %v441 = vsub.s32 0, %v440
        %v442 = vrot.slane %v352, %v441
        %v444 = vmul.f32 %v376, %v442
        %v445 = vmul.f32 %v377, %v442
        %v446 = vmul.f32 %v378, %v442
        %v447 = vmul.f32 %v379, %v442
        %v448 = vmul.f32 %v380, %v442
        %v449 = vmul.f32 %v381, %v442
        %v450 = vmul.f32 %v382, %v442
        %v451 = vmul.f32 %v383, %v442
        %v452 = vmul.f32 %v384, %v442
        %v453 = vmul.f32 %v385, %v442
        %v454 = vmul.f32 %v386, %v442
        %v455 = vmul.f32 %v387, %v442
        %v456 = vmul.f32 %v388, %v442
        %v457 = vmul.f32 %v389, %v442
        %v458 = vmul.f32 %v390, %v442
        %v459 = vmul.f32 %v391, %v442
        %v460 = vmul.f32 %v392, %v442
        %v461 = vmul.f32 %v393, %v442
        %v462 = vmul.f32 %v394, %v442
        %v463 = vmul.f32 %v395, %v442
        %v464 = vmul.f32 %v396, %v442
        %v465 = vmul.f32 %v397, %v442
        %v466 = vmul.f32 %v398, %v442
        %v467 = vmul.f32 %v399, %v442
        %vm492 = vcmask 1046528
        %v493 = vrot.slane %v444, 1
        %v494 = vrot.slane %v445, 1
        %v495 = vsel %vm492, %v493, %v494
        %v496 = vrot.slane %v446, 1
        %v497 = vsel %vm492, %v494, %v496
        %v498 = vrot.slane %v447, 1
        %v499 = vrot.slane %v448, 1
        %v500 = vsel %vm492, %v498, %v499
        %v501 = vrot.slane %v449, 1
        %v502 = vsel %vm492, %v499, %v501
        %v503 = vrot.slane %v450, 1
        %v504 = vrot.slane %v451, 1
        %v505 = vsel %vm492, %v503, %v504
        %v506 = vrot.slane %v452, 1
        %v507 = vsel %vm492, %v504, %v506
        %v508 = vrot.slane %v453, 1
        %v509 = vrot.slane %v454, 1
        %v510 = vsel %vm492, %v508, %v509
        %v511 = vrot.slane %v455, 1
        %v512 = vsel %vm492, %v509, %v511
        %v513 = vrot.slane %v456, 1
        %v514 = vrot.slane %v457, 1
        %v515 = vsel %vm492, %v513, %v514
        %v516 = vrot.slane %v458, 1
        %v517 = vsel %vm492, %v514, %v516
        %v518 = vrot.slane %v459, 1
        %v519 = vrot.slane %v460, 1
        %v520 = vsel %vm492, %v518, %v519
        %v521 = vrot.slane %v461, 1
        %v522 = vsel %vm492, %v519, %v521
        %v523 = vrot.slane %v462, 1
        %v524 = vrot.slane %v463, 1
        %v525 = vsel %vm492, %v523, %v524
        %v526 = vrot.slane %v464, 1
        %v527 = vsel %vm492, %v524, %v526
        %v528 = vrot.slane %v465, 1
        %v529 = vrot.slane %v466, 1
        %v530 = vsel %vm492, %v528, %v529
        %v531 = vrot.slane %v467, 1
        %v532 = vsel %vm492, %v529, %v531
        %v549 = vadd.f32 %v422, %v495
        %v550 = vadd.f32 %v423, %v497
        %v551 = vadd.f32 %v424, %v500
        %v552 = vadd.f32 %v425, %v502
        %v553 = vadd.f32 %v426, %v505
        %v554 = vadd.f32 %v427, %v507
        %v555 = vadd.f32 %v428, %v510
        %v556 = vadd.f32 %v429, %v512
        %v557 = vadd.f32 %v430, %v515
        %v558 = vadd.f32 %v431, %v517
        %v559 = vadd.f32 %v432, %v520
        %v560 = vadd.f32 %v433, %v522
        %v561 = vadd.f32 %v434, %v525
        %v562 = vadd.f32 %v435, %v527
        %v563 = vadd.f32 %v436, %v530
        %v564 = vadd.f32 %v437, %v532
        %v566 = vlaneseq
        %v567 = vshrl.u32 %v566, 7
        %v568 = vsub.s32 0, %v567
        %v569 = vrot.slane %v353, %v568
        %v571 = vmul.f32 %v376, %v569
        %v572 = vmul.f32 %v377, %v569
        %v573 = vmul.f32 %v378, %v569
        %v574 = vmul.f32 %v379, %v569
        %v575 = vmul.f32 %v380, %v569
        %v576 = vmul.f32 %v381, %v569
        %v577 = vmul.f32 %v382, %v569
        %v578 = vmul.f32 %v383, %v569
        %v579 = vmul.f32 %v384, %v569
        %v580 = vmul.f32 %v385, %v569
        %v581 = vmul.f32 %v386, %v569
        %v582 = vmul.f32 %v387, %v569
        %v583 = vmul.f32 %v388, %v569
        %v584 = vmul.f32 %v389, %v569
        %v585 = vmul.f32 %v390, %v569
        %v586 = vmul.f32 %v391, %v569
        %v587 = vmul.f32 %v392, %v569
        %v588 = vmul.f32 %v393, %v569
        %v589 = vmul.f32 %v394, %v569
        %v590 = vmul.f32 %v395, %v569
        %v591 = vmul.f32 %v396, %v569
        %v592 = vmul.f32 %v397, %v569
        %v593 = vmul.f32 %v398, %v569
        %v594 = vmul.f32 %v399, %v569
        %vm619 = vcmask 1045504
        %v620 = vrot.slane %v571, 2
        %v621 = vrot.slane %v572, 2
        %v622 = vsel %vm619, %v620, %v621
        %v623 = vrot.slane %v573, 2
        %v624 = vsel %vm619, %v621, %v623
        %v625 = vrot.slane %v574, 2
        %v626 = vrot.slane %v575, 2
        %v627 = vsel %vm619, %v625, %v626
        %v628 = vrot.slane %v576, 2
        %v629 = vsel %vm619, %v626, %v628
        %v630 = vrot.slane %v577, 2
        %v631 = vrot.slane %v578, 2
        %v632 = vsel %vm619, %v630, %v631
        %v633 = vrot.slane %v579, 2
        %v634 = vsel %vm619, %v631, %v633
        %v635 = vrot.slane %v580, 2
        %v636 = vrot.slane %v581, 2
        %v637 = vsel %vm619, %v635, %v636
        %v638 = vrot.slane %v582, 2
        %v639 = vsel %vm619, %v636, %v638
        %v640 = vrot.slane %v583, 2
        %v641 = vrot.slane %v584, 2
        %v642 = vsel %vm619, %v640, %v641
        %v643 = vrot.slane %v585, 2
        %v644 = vsel %vm619, %v641, %v643
        %v645 = vrot.slane %v586, 2
        %v646 = vrot.slane %v587, 2
        %v647 = vsel %vm619, %v645, %v646
        %v648 = vrot.slane %v588, 2
        %v649 = vsel %vm619, %v646, %v648
        %v650 = vrot.slane %v589, 2
        %v651 = vrot.slane %v590, 2
        %v652 = vsel %vm619, %v650, %v651
        %v653 = vrot.slane %v591, 2
        %v654 = vsel %vm619, %v651, %v653
        %v655 = vrot.slane %v592, 2
        %v656 = vrot.slane %v593, 2
        %v657 = vsel %vm619, %v655, %v656
        %v658 = vrot.slane %v594, 2
        %v659 = vsel %vm619, %v656, %v658
        %v676 = vadd.f32 %v549, %v622
        %v677 = vadd.f32 %v550, %v624
        %v678 = vadd.f32 %v551, %v627
        %v679 = vadd.f32 %v552, %v629
        %v680 = vadd.f32 %v553, %v632
        %v681 = vadd.f32 %v554, %v634
        %v682 = vadd.f32 %v555, %v637
        %v683 = vadd.f32 %v556, %v639
        %v684 = vadd.f32 %v557, %v642
        %v685 = vadd.f32 %v558, %v644
        %v686 = vadd.f32 %v559, %v647
        %v687 = vadd.f32 %v560, %v649
        %v688 = vadd.f32 %v561, %v652
        %v689 = vadd.f32 %v562, %v654
        %v690 = vadd.f32 %v563, %v657
        %v691 = vadd.f32 %v564, %v659
        %s692 = sadd.s32 0, 1
        %s693 = smul.u32 %s692, 24
        %s694 = scalar_lea.vmem [#allocation2], %s693
        %v695 = vld [vmem:[%s694] sm:$0xff]
        %v696 = vld [vmem:[%s694 + $0x8] sm:$0xff]
        %v697 = vld [vmem:[%s694 + $0x10] sm:$0x3]
        %v698 = vld [vmem:[%s694 + $0x18] sm:$0xff]
        %v699 = vld [vmem:[%s694 + $0x20] sm:$0xff]
        %v700 = vld [vmem:[%s694 + $0x28] sm:$0x3]
        %v701 = vld [vmem:[%s694 + $0x30] sm:$0xff]
        %v702 = vld [vmem:[%s694 + $0x38] sm:$0xff]
        %v703 = vld [vmem:[%s694 + $0x40] sm:$0x3]
        %v704 = vld [vmem:[%s694 + $0x48] sm:$0xff]
        %v705 = vld [vmem:[%s694 + $0x50] sm:$0xff]
        %v706 = vld [vmem:[%s694 + $0x58] sm:$0x3]
        %v707 = vld [vmem:[%s694 + $0x60] sm:$0xff]
        %v708 = vld [vmem:[%s694 + $0x68] sm:$0xff]
        %v709 = vld [vmem:[%s694 + $0x70] sm:$0x3]
        %v710 = vld [vmem:[%s694 + $0x78] sm:$0xff]
        %v711 = vld [vmem:[%s694 + $0x80] sm:$0xff]
        %v712 = vld [vmem:[%s694 + $0x88] sm:$0x3]
        %v713 = vld [vmem:[%s694 + $0x90] sm:$0xff]
        %v714 = vld [vmem:[%s694 + $0x98] sm:$0xff]
        %v715 = vld [vmem:[%s694 + $0xa0] sm:$0x3]
        %v716 = vld [vmem:[%s694 + $0xa8] sm:$0xff]
        %v717 = vld [vmem:[%s694 + $0xb0] sm:$0xff]
        %v718 = vld [vmem:[%s694 + $0xb8] sm:$0x3]
        %v720 = vlaneseq
        %v721 = vshrl.u32 %v720, 7
        %v722 = vsub.s32 0, %v721
        %v723 = vrot.slane %v354, %v722
        %v725 = vmul.f32 %v695, %v723
        %v726 = vmul.f32 %v696, %v723
        %v727 = vmul.f32 %v698, %v723
        %v728 = vmul.f32 %v699, %v723
        %v729 = vmul.f32 %v701, %v723
        %v730 = vmul.f32 %v702, %v723
        %v731 = vmul.f32 %v704, %v723
        %v732 = vmul.f32 %v705, %v723
        %v733 = vmul.f32 %v707, %v723
        %v734 = vmul.f32 %v708, %v723
        %v735 = vmul.f32 %v710, %v723
        %v736 = vmul.f32 %v711, %v723
        %v737 = vmul.f32 %v713, %v723
        %v738 = vmul.f32 %v714, %v723
        %v739 = vmul.f32 %v716, %v723
        %v740 = vmul.f32 %v717, %v723
        %v741 = vadd.f32 %v676, %v725
        %v742 = vadd.f32 %v677, %v726
        %v743 = vadd.f32 %v678, %v727
        %v744 = vadd.f32 %v679, %v728
        %v745 = vadd.f32 %v680, %v729
        %v746 = vadd.f32 %v681, %v730
        %v747 = vadd.f32 %v682, %v731
        %v748 = vadd.f32 %v683, %v732
        %v749 = vadd.f32 %v684, %v733
        %v750 = vadd.f32 %v685, %v734
        %v751 = vadd.f32 %v686, %v735
        %v752 = vadd.f32 %v687, %v736
        %v753 = vadd.f32 %v688, %v737
        %v754 = vadd.f32 %v689, %v738
        %v755 = vadd.f32 %v690, %v739
        %v756 = vadd.f32 %v691, %v740
        %v758 = vlaneseq
        %v759 = vshrl.u32 %v758, 7
        %v760 = vsub.s32 0, %v759
        %v761 = vrot.slane %v355, %v760
        %v763 = vmul.f32 %v695, %v761
        %v764 = vmul.f32 %v696, %v761
        %v765 = vmul.f32 %v697, %v761
        %v766 = vmul.f32 %v698, %v761
        %v767 = vmul.f32 %v699, %v761
        %v768 = vmul.f32 %v700, %v761
        %v769 = vmul.f32 %v701, %v761
        %v770 = vmul.f32 %v702, %v761
        %v771 = vmul.f32 %v703, %v761
        %v772 = vmul.f32 %v704, %v761
        %v773 = vmul.f32 %v705, %v761
        %v774 = vmul.f32 %v706, %v761
        %v775 = vmul.f32 %v707, %v761
        %v776 = vmul.f32 %v708, %v761
        %v777 = vmul.f32 %v709, %v761
        %v778 = vmul.f32 %v710, %v761
        %v779 = vmul.f32 %v711, %v761
        %v780 = vmul.f32 %v712, %v761
        %v781 = vmul.f32 %v713, %v761
        %v782 = vmul.f32 %v714, %v761
        %v783 = vmul.f32 %v715, %v761
        %v784 = vmul.f32 %v716, %v761
        %v785 = vmul.f32 %v717, %v761
        %v786 = vmul.f32 %v718, %v761
        %v811 = vrot.slane %v763, 1
        %v812 = vrot.slane %v764, 1
        %v813 = vsel %vm492, %v811, %v812
        %v814 = vrot.slane %v765, 1
        %v815 = vsel %vm492, %v812, %v814
        %v816 = vrot.slane %v766, 1
        %v817 = vrot.slane %v767, 1
        %v818 = vsel %vm492, %v816, %v817
        %v819 = vrot.slane %v768, 1
        %v820 = vsel %vm492, %v817, %v819
        %v821 = vrot.slane %v769, 1
        %v822 = vrot.slane %v770, 1
        %v823 = vsel %vm492, %v821, %v822
        %v824 = vrot.slane %v771, 1
        %v825 = vsel %vm492, %v822, %v824
        %v826 = vrot.slane %v772, 1
        %v827 = vrot.slane %v773, 1
        %v828 = vsel %vm492, %v826, %v827
        %v829 = vrot.slane %v774, 1
        %v830 = vsel %vm492, %v827, %v829
        %v831 = vrot.slane %v775, 1
        %v832 = vrot.slane %v776, 1
        %v833 = vsel %vm492, %v831, %v832
        %v834 = vrot.slane %v777, 1
        %v835 = vsel %vm492, %v832, %v834
        %v836 = vrot.slane %v778, 1
        %v837 = vrot.slane %v779, 1
        %v838 = vsel %vm492, %v836, %v837
        %v839 = vrot.slane %v780, 1
        %v840 = vsel %vm492, %v837, %v839
        %v841 = vrot.slane %v781, 1
        %v842 = vrot.slane %v782, 1
        %v843 = vsel %vm492, %v841, %v842
        %v844 = vrot.slane %v783, 1
        %v845 = vsel %vm492, %v842, %v844
        %v846 = vrot.slane %v784, 1
        %v847 = vrot.slane %v785, 1
        %v848 = vsel %vm492, %v846, %v847
        %v849 = vrot.slane %v786, 1
        %v850 = vsel %vm492, %v847, %v849
        %v867 = vadd.f32 %v741, %v813
        %v868 = vadd.f32 %v742, %v815
        %v869 = vadd.f32 %v743, %v818
        %v870 = vadd.f32 %v744, %v820
        %v871 = vadd.f32 %v745, %v823
        %v872 = vadd.f32 %v746, %v825
        %v873 = vadd.f32 %v747, %v828
        %v874 = vadd.f32 %v748, %v830
        %v875 = vadd.f32 %v749, %v833
        %v876 = vadd.f32 %v750, %v835
        %v877 = vadd.f32 %v751, %v838
        %v878 = vadd.f32 %v752, %v840
        %v879 = vadd.f32 %v753, %v843
        %v880 = vadd.f32 %v754, %v845
        %v881 = vadd.f32 %v755, %v848
        %v882 = vadd.f32 %v756, %v850
        %v884 = vlaneseq
        %v885 = vshrl.u32 %v884, 7
        %v886 = vsub.s32 0, %v885
        %v887 = vrot.slane %v356, %v886
        %v889 = vmul.f32 %v695, %v887
        %v890 = vmul.f32 %v696, %v887
        %v891 = vmul.f32 %v697, %v887
        %v892 = vmul.f32 %v698, %v887
        %v893 = vmul.f32 %v699, %v887
        %v894 = vmul.f32 %v700, %v887
        %v895 = vmul.f32 %v701, %v887
        %v896 = vmul.f32 %v702, %v887
        %v897 = vmul.f32 %v703, %v887
        %v898 = vmul.f32 %v704, %v887
        %v899 = vmul.f32 %v705, %v887
        %v900 = vmul.f32 %v706, %v887
        %v901 = vmul.f32 %v707, %v887
        %v902 = vmul.f32 %v708, %v887
        %v903 = vmul.f32 %v709, %v887
        %v904 = vmul.f32 %v710, %v887
        %v905 = vmul.f32 %v711, %v887
        %v906 = vmul.f32 %v712, %v887
        %v907 = vmul.f32 %v713, %v887
        %v908 = vmul.f32 %v714, %v887
        %v909 = vmul.f32 %v715, %v887
        %v910 = vmul.f32 %v716, %v887
        %v911 = vmul.f32 %v717, %v887
        %v912 = vmul.f32 %v718, %v887
        %v937 = vrot.slane %v889, 2
        %v938 = vrot.slane %v890, 2
        %v939 = vsel %vm619, %v937, %v938
        %v940 = vrot.slane %v891, 2
        %v941 = vsel %vm619, %v938, %v940
        %v942 = vrot.slane %v892, 2
        %v943 = vrot.slane %v893, 2
        %v944 = vsel %vm619, %v942, %v943
        %v945 = vrot.slane %v894, 2
        %v946 = vsel %vm619, %v943, %v945
        %v947 = vrot.slane %v895, 2
        %v948 = vrot.slane %v896, 2
        %v949 = vsel %vm619, %v947, %v948
        %v950 = vrot.slane %v897, 2
        %v951 = vsel %vm619, %v948, %v950
        %v952 = vrot.slane %v898, 2
        %v953 = vrot.slane %v899, 2
        %v954 = vsel %vm619, %v952, %v953
        %v955 = vrot.slane %v900, 2
        %v956 = vsel %vm619, %v953, %v955
        %v957 = vrot.slane %v901, 2
        %v958 = vrot.slane %v902, 2
        %v959 = vsel %vm619, %v957, %v958
        %v960 = vrot.slane %v903, 2
        %v961 = vsel %vm619, %v958, %v960
        %v962 = vrot.slane %v904, 2
        %v963 = vrot.slane %v905, 2
        %v964 = vsel %vm619, %v962, %v963
        %v965 = vrot.slane %v906, 2
        %v966 = vsel %vm619, %v963, %v965
        %v967 = vrot.slane %v907, 2
        %v968 = vrot.slane %v908, 2
        %v969 = vsel %vm619, %v967, %v968
        %v970 = vrot.slane %v909, 2
        %v971 = vsel %vm619, %v968, %v970
        %v972 = vrot.slane %v910, 2
        %v973 = vrot.slane %v911, 2
        %v974 = vsel %vm619, %v972, %v973
        %v975 = vrot.slane %v912, 2
        %v976 = vsel %vm619, %v973, %v975
        %v993 = vadd.f32 %v867, %v939
        %v994 = vadd.f32 %v868, %v941
        %v995 = vadd.f32 %v869, %v944
        %v996 = vadd.f32 %v870, %v946
        %v997 = vadd.f32 %v871, %v949
        %v998 = vadd.f32 %v872, %v951
        %v999 = vadd.f32 %v873, %v954
        %v1000 = vadd.f32 %v874, %v956
        %v1001 = vadd.f32 %v875, %v959
        %v1002 = vadd.f32 %v876, %v961
        %v1003 = vadd.f32 %v877, %v964
        %v1004 = vadd.f32 %v878, %v966
        %v1005 = vadd.f32 %v879, %v969
        %v1006 = vadd.f32 %v880, %v971
        %v1007 = vadd.f32 %v881, %v974
        %v1008 = vadd.f32 %v882, %v976
        %s1009 = sadd.s32 0, 2
        %s1010 = smul.u32 %s1009, 24
        %s1011 = scalar_lea.vmem [#allocation2], %s1010
        %v1012 = vld [vmem:[%s1011] sm:$0xff]
        %v1013 = vld [vmem:[%s1011 + $0x8] sm:$0xff]
        %v1014 = vld [vmem:[%s1011 + $0x10] sm:$0x3]
        %v1015 = vld [vmem:[%s1011 + $0x18] sm:$0xff]
        %v1016 = vld [vmem:[%s1011 + $0x20] sm:$0xff]
        %v1017 = vld [vmem:[%s1011 + $0x28] sm:$0x3]
        %v1018 = vld [vmem:[%s1011 + $0x30] sm:$0xff]
        %v1019 = vld [vmem:[%s1011 + $0x38] sm:$0xff]
        %v1020 = vld [vmem:[%s1011 + $0x40] sm:$0x3]
        %v1021 = vld [vmem:[%s1011 + $0x48] sm:$0xff]
        %v1022 = vld [vmem:[%s1011 + $0x50] sm:$0xff]
        %v1023 = vld [vmem:[%s1011 + $0x58] sm:$0x3]
        %v1024 = vld [vmem:[%s1011 + $0x60] sm:$0xff]
        %v1025 = vld [vmem:[%s1011 + $0x68] sm:$0xff]
        %v1026 = vld [vmem:[%s1011 + $0x70] sm:$0x3]
        %v1027 = vld [vmem:[%s1011 + $0x78] sm:$0xff]
        %v1028 = vld [vmem:[%s1011 + $0x80] sm:$0xff]
        %v1029 = vld [vmem:[%s1011 + $0x88] sm:$0x3]
        %v1030 = vld [vmem:[%s1011 + $0x90] sm:$0xff]
        %v1031 = vld [vmem:[%s1011 + $0x98] sm:$0xff]
        %v1032 = vld [vmem:[%s1011 + $0xa0] sm:$0x3]
        %v1033 = vld [vmem:[%s1011 + $0xa8] sm:$0xff]
        %v1034 = vld [vmem:[%s1011 + $0xb0] sm:$0xff]
        %v1035 = vld [vmem:[%s1011 + $0xb8] sm:$0x3]
        %v1037 = vlaneseq
        %v1038 = vshrl.u32 %v1037, 7
        %v1039 = vsub.s32 0, %v1038
        %v1040 = vrot.slane %v357, %v1039
        %v1042 = vmul.f32 %v1012, %v1040
        %v1043 = vmul.f32 %v1013, %v1040
        %v1044 = vmul.f32 %v1015, %v1040
        %v1045 = vmul.f32 %v1016, %v1040
        %v1046 = vmul.f32 %v1018, %v1040
        %v1047 = vmul.f32 %v1019, %v1040
        %v1048 = vmul.f32 %v1021, %v1040
        %v1049 = vmul.f32 %v1022, %v1040
        %v1050 = vmul.f32 %v1024, %v1040
        %v1051 = vmul.f32 %v1025, %v1040
        %v1052 = vmul.f32 %v1027, %v1040
        %v1053 = vmul.f32 %v1028, %v1040
        %v1054 = vmul.f32 %v1030, %v1040
        %v1055 = vmul.f32 %v1031, %v1040
        %v1056 = vmul.f32 %v1033, %v1040
        %v1057 = vmul.f32 %v1034, %v1040
        %v1058 = vadd.f32 %v993, %v1042
        %v1059 = vadd.f32 %v994, %v1043
        %v1060 = vadd.f32 %v995, %v1044
        %v1061 = vadd.f32 %v996, %v1045
        %v1062 = vadd.f32 %v997, %v1046
        %v1063 = vadd.f32 %v998, %v1047
        %v1064 = vadd.f32 %v999, %v1048
        %v1065 = vadd.f32 %v1000, %v1049
        %v1066 = vadd.f32 %v1001, %v1050
        %v1067 = vadd.f32 %v1002, %v1051
        %v1068 = vadd.f32 %v1003, %v1052
        %v1069 = vadd.f32 %v1004, %v1053
        %v1070 = vadd.f32 %v1005, %v1054
        %v1071 = vadd.f32 %v1006, %v1055
        %v1072 = vadd.f32 %v1007, %v1056
        %v1073 = vadd.f32 %v1008, %v1057
        %v1075 = vlaneseq
        %v1076 = vshrl.u32 %v1075, 7
        %v1077 = vsub.s32 0, %v1076
        %v1078 = vrot.slane %v358, %v1077
        %v1080 = vmul.f32 %v1012, %v1078
        %v1081 = vmul.f32 %v1013, %v1078
        %v1082 = vmul.f32 %v1014, %v1078
        %v1083 = vmul.f32 %v1015, %v1078
        %v1084 = vmul.f32 %v1016, %v1078
        %v1085 = vmul.f32 %v1017, %v1078
        %v1086 = vmul.f32 %v1018, %v1078
        %v1087 = vmul.f32 %v1019, %v1078
        %v1088 = vmul.f32 %v1020, %v1078
        %v1089 = vmul.f32 %v1021, %v1078
        %v1090 = vmul.f32 %v1022, %v1078
        %v1091 = vmul.f32 %v1023, %v1078
        %v1092 = vmul.f32 %v1024, %v1078
        %v1093 = vmul.f32 %v1025, %v1078
        %v1094 = vmul.f32 %v1026, %v1078
        %v1095 = vmul.f32 %v1027, %v1078
        %v1096 = vmul.f32 %v1028, %v1078
        %v1097 = vmul.f32 %v1029, %v1078
        %v1098 = vmul.f32 %v1030, %v1078
        %v1099 = vmul.f32 %v1031, %v1078
        %v1100 = vmul.f32 %v1032, %v1078
        %v1101 = vmul.f32 %v1033, %v1078
        %v1102 = vmul.f32 %v1034, %v1078
        %v1103 = vmul.f32 %v1035, %v1078
        %v1128 = vrot.slane %v1080, 1
        %v1129 = vrot.slane %v1081, 1
        %v1130 = vsel %vm492, %v1128, %v1129
        %v1131 = vrot.slane %v1082, 1
        %v1132 = vsel %vm492, %v1129, %v1131
        %v1133 = vrot.slane %v1083, 1
        %v1134 = vrot.slane %v1084, 1
        %v1135 = vsel %vm492, %v1133, %v1134
        %v1136 = vrot.slane %v1085, 1
        %v1137 = vsel %vm492, %v1134, %v1136
        %v1138 = vrot.slane %v1086, 1
        %v1139 = vrot.slane %v1087, 1
        %v1140 = vsel %vm492, %v1138, %v1139
        %v1141 = vrot.slane %v1088, 1
        %v1142 = vsel %vm492, %v1139, %v1141
        %v1143 = vrot.slane %v1089, 1
        %v1144 = vrot.slane %v1090, 1
        %v1145 = vsel %vm492, %v1143, %v1144
        %v1146 = vrot.slane %v1091, 1
        %v1147 = vsel %vm492, %v1144, %v1146
        %v1148 = vrot.slane %v1092, 1
        %v1149 = vrot.slane %v1093, 1
        %v1150 = vsel %vm492, %v1148, %v1149
        %v1151 = vrot.slane %v1094, 1
        %v1152 = vsel %vm492, %v1149, %v1151
        %v1153 = vrot.slane %v1095, 1
        %v1154 = vrot.slane %v1096, 1
        %v1155 = vsel %vm492, %v1153, %v1154
        %v1156 = vrot.slane %v1097, 1
        %v1157 = vsel %vm492, %v1154, %v1156
        %v1158 = vrot.slane %v1098, 1
        %v1159 = vrot.slane %v1099, 1
        %v1160 = vsel %vm492, %v1158, %v1159
        %v1161 = vrot.slane %v1100, 1
        %v1162 = vsel %vm492, %v1159, %v1161
        %v1163 = vrot.slane %v1101, 1
        %v1164 = vrot.slane %v1102, 1
        %v1165 = vsel %vm492, %v1163, %v1164
        %v1166 = vrot.slane %v1103, 1
        %v1167 = vsel %vm492, %v1164, %v1166
        %v1184 = vadd.f32 %v1058, %v1130
        %v1185 = vadd.f32 %v1059, %v1132
        %v1186 = vadd.f32 %v1060, %v1135
        %v1187 = vadd.f32 %v1061, %v1137
        %v1188 = vadd.f32 %v1062, %v1140
        %v1189 = vadd.f32 %v1063, %v1142
        %v1190 = vadd.f32 %v1064, %v1145
        %v1191 = vadd.f32 %v1065, %v1147
        %v1192 = vadd.f32 %v1066, %v1150
        %v1193 = vadd.f32 %v1067, %v1152
        %v1194 = vadd.f32 %v1068, %v1155
        %v1195 = vadd.f32 %v1069, %v1157
        %v1196 = vadd.f32 %v1070, %v1160
        %v1197 = vadd.f32 %v1071, %v1162
        %v1198 = vadd.f32 %v1072, %v1165
        %v1199 = vadd.f32 %v1073, %v1167
        %v1201 = vlaneseq
        %v1202 = vshrl.u32 %v1201, 7
        %v1203 = vsub.s32 0, %v1202
        %v1204 = vrot.slane %v359, %v1203
        %v1206 = vmul.f32 %v1012, %v1204
        %v1207 = vmul.f32 %v1013, %v1204
        %v1208 = vmul.f32 %v1014, %v1204
        %v1209 = vmul.f32 %v1015, %v1204
        %v1210 = vmul.f32 %v1016, %v1204
        %v1211 = vmul.f32 %v1017, %v1204
        %v1212 = vmul.f32 %v1018, %v1204
        %v1213 = vmul.f32 %v1019, %v1204
        %v1214 = vmul.f32 %v1020, %v1204
        %v1215 = vmul.f32 %v1021, %v1204
        %v1216 = vmul.f32 %v1022, %v1204
        %v1217 = vmul.f32 %v1023, %v1204
        %v1218 = vmul.f32 %v1024, %v1204
        %v1219 = vmul.f32 %v1025, %v1204
        %v1220 = vmul.f32 %v1026, %v1204
        %v1221 = vmul.f32 %v1027, %v1204
        %v1222 = vmul.f32 %v1028, %v1204
        %v1223 = vmul.f32 %v1029, %v1204
        %v1224 = vmul.f32 %v1030, %v1204
        %v1225 = vmul.f32 %v1031, %v1204
        %v1226 = vmul.f32 %v1032, %v1204
        %v1227 = vmul.f32 %v1033, %v1204
        %v1228 = vmul.f32 %v1034, %v1204
        %v1229 = vmul.f32 %v1035, %v1204
        %v1254 = vrot.slane %v1206, 2
        %v1255 = vrot.slane %v1207, 2
        %v1256 = vsel %vm619, %v1254, %v1255
        %v1257 = vrot.slane %v1208, 2
        %v1258 = vsel %vm619, %v1255, %v1257
        %v1259 = vrot.slane %v1209, 2
        %v1260 = vrot.slane %v1210, 2
        %v1261 = vsel %vm619, %v1259, %v1260
        %v1262 = vrot.slane %v1211, 2
        %v1263 = vsel %vm619, %v1260, %v1262
        %v1264 = vrot.slane %v1212, 2
        %v1265 = vrot.slane %v1213, 2
        %v1266 = vsel %vm619, %v1264, %v1265
        %v1267 = vrot.slane %v1214, 2
        %v1268 = vsel %vm619, %v1265, %v1267
        %v1269 = vrot.slane %v1215, 2
        %v1270 = vrot.slane %v1216, 2
        %v1271 = vsel %vm619, %v1269, %v1270
        %v1272 = vrot.slane %v1217, 2
        %v1273 = vsel %vm619, %v1270, %v1272
        %v1274 = vrot.slane %v1218, 2
        %v1275 = vrot.slane %v1219, 2
        %v1276 = vsel %vm619, %v1274, %v1275
        %v1277 = vrot.slane %v1220, 2
        %v1278 = vsel %vm619, %v1275, %v1277
        %v1279 = vrot.slane %v1221, 2
        %v1280 = vrot.slane %v1222, 2
        %v1281 = vsel %vm619, %v1279, %v1280
        %v1282 = vrot.slane %v1223, 2
        %v1283 = vsel %vm619, %v1280, %v1282
        %v1284 = vrot.slane %v1224, 2
        %v1285 = vrot.slane %v1225, 2
        %v1286 = vsel %vm619, %v1284, %v1285
        %v1287 = vrot.slane %v1226, 2
        %v1288 = vsel %vm619, %v1285, %v1287
        %v1289 = vrot.slane %v1227, 2
        %v1290 = vrot.slane %v1228, 2
        %v1291 = vsel %vm619, %v1289, %v1290
        %v1292 = vrot.slane %v1229, 2
        %v1293 = vsel %vm619, %v1290, %v1292
        %v1310 = vadd.f32 %v1184, %v1256
        %v1311 = vadd.f32 %v1185, %v1258
        %v1312 = vadd.f32 %v1186, %v1261
        %v1313 = vadd.f32 %v1187, %v1263
        %v1314 = vadd.f32 %v1188, %v1266
        %v1315 = vadd.f32 %v1189, %v1268
        %v1316 = vadd.f32 %v1190, %v1271
        %v1317 = vadd.f32 %v1191, %v1273
        %v1318 = vadd.f32 %v1192, %v1276
        %v1319 = vadd.f32 %v1193, %v1278
        %v1320 = vadd.f32 %v1194, %v1281
        %v1321 = vadd.f32 %v1195, %v1283
        %v1322 = vadd.f32 %v1196, %v1286
        %v1323 = vadd.f32 %v1197, %v1288
        %v1324 = vadd.f32 %v1198, %v1291
        %v1325 = vadd.f32 %v1199, %v1293
        %v1327 = vlaneseq
        %v1328 = vshrl.u32 %v1327, 7
        %v1329 = vsub.s32 0, %v1328
        %v1330 = vrot.slane %v360, %v1329
        %v1332 = vadd.f32 %v1310, %v1330
        %v1333 = vadd.f32 %v1311, %v1330
        %v1334 = vadd.f32 %v1312, %v1330
        %v1335 = vadd.f32 %v1313, %v1330
        %v1336 = vadd.f32 %v1314, %v1330
        %v1337 = vadd.f32 %v1315, %v1330
        %v1338 = vadd.f32 %v1316, %v1330
        %v1339 = vadd.f32 %v1317, %v1330
        %v1340 = vadd.f32 %v1318, %v1330
        %v1341 = vadd.f32 %v1319, %v1330
        %v1342 = vadd.f32 %v1320, %v1330
        %v1343 = vadd.f32 %v1321, %v1330
        %v1344 = vadd.f32 %v1322, %v1330
        %v1345 = vadd.f32 %v1323, %v1330
        %v1346 = vadd.f32 %v1324, %v1330
        %v1347 = vadd.f32 %v1325, %v1330
        %v1348 = vpack.c.bf16 %v1333, %v1332
        %v1349 = vpack.c.bf16 %v1335, %v1334
        %v1350 = vpack.c.bf16 %v1337, %v1336
        %v1351 = vpack.c.bf16 %v1339, %v1338
        %v1352 = vpack.c.bf16 %v1341, %v1340
        %v1353 = vpack.c.bf16 %v1343, %v1342
        %v1354 = vpack.c.bf16 %v1345, %v1344
        %v1355 = vpack.c.bf16 %v1347, %v1346
        %v1357 = vlaneseq
        %v1358 = vshrl.u32 %v1357, 7
        %v1359 = vsub.s32 0, %v1358
        %v1360 = vrot.slane %v373, %v1359
        %v1363 = vsel %vm244, %v1348, 0
        %v1366 = vsel %vm244, %v1349, 0
        %v1369 = vsel %vm244, %v1350, 0
        %v1372 = vsel %vm244, %v1351, 0
        %v1375 = vsel %vm244, %v1352, 0
        %v1378 = vsel %vm244, %v1353, 0
        %v1381 = vsel %vm244, %v1354, 0
        %v1384 = vsel %vm244, %v1355, 0
        %1386 = vmatprep.subr.bf16.mxu0 0
        %1387 = vmatpush1.bf16.msra.mxu0 %v369
        %1388 = vmatprep.subr.bf16.mxu0 0
        %1389 = vmatpush1.bf16.msra.mxu0 %v370
        %1390 = vmatprep.subr.bf16.mxu0 0
        %1391 = vmatpush1.bf16.msra.mxu0 %v371
        %1392 = vmatprep.subr.bf16.mxu0 0
        %1393 = vmatpush1.bf16.msra.mxu0 %v372
        %1394 = vmatprep.subr.bf16.mxu0 0
        %1395 = vmatpush1.bf16.msra.mxu0 0
        %1396 = vmatprep.subr.bf16.mxu0 0
        %1397 = vmatpush1.bf16.msra.mxu0 0
        %1398 = vmatprep.subr.bf16.mxu0 0
        %1399 = vmatpush1.bf16.msra.mxu0 0
        %1400 = vmatprep.subr.bf16.mxu0 0
        %1401 = vmatpush1.bf16.msra.mxu0 0
        %1402 = vmatprep.subr.bf16.mxu0 0
        %1403 = vmatpush1.bf16.msra.mxu0 0
        %1404 = vmatprep.subr.bf16.mxu0 0
        %1405 = vmatpush1.bf16.msra.mxu0 0
        %1406 = vmatprep.subr.bf16.mxu0 0
        %1407 = vmatpush1.bf16.msra.mxu0 0
        %1408 = vmatprep.subr.bf16.mxu0 0
        %1409 = vmatpush1.bf16.msra.mxu0 0
        %1410 = vmatprep.subr.bf16.mxu0 0
        %1411 = vmatpush1.bf16.msra.mxu0 0
        %1412 = vmatprep.subr.bf16.mxu0 0
        %1413 = vmatpush1.bf16.msra.mxu0 0
        %1414 = vmatprep.subr.bf16.mxu0 0
        %1415 = vmatpush1.bf16.msra.mxu0 0
        %1416 = vmatprep.subr.bf16.mxu0 0
        %1417 = vmatpush1.bf16.msra.mxu0 0
        %1418 = vmatprep.mubr.bf16.mxu0 0
        %1419 = vmatmul.mubr.bf16.gmra.mrb[0].mxu0 %v1363
        %v1420 = vpop.f32.mrb[0].mxu0
        %v1421 = vadd.f32 %v1360, %v1420
        %v1422 = vpop.f32.mrb[0].mxu0
        %v1423 = vpop.f32.mrb[0].mxu0
        %v1424 = vadd.f32 %v1360, %v1423
        %v1425 = vpop.f32.mrb[0].mxu0
        %1426 = vmatprep.mubr.bf16.mxu0 0
        %1427 = vmatmul.mubr.bf16.gmra.mrb[0].mxu0 %v1366
        %v1428 = vpop.f32.mrb[0].mxu0
        %v1429 = vadd.f32 %v1360, %v1428
        %v1430 = vpop.f32.mrb[0].mxu0
        %v1431 = vpop.f32.mrb[0].mxu0
        %v1432 = vadd.f32 %v1360, %v1431
        %v1433 = vpop.f32.mrb[0].mxu0
        %1434 = vmatprep.mubr.bf16.mxu0 0
        %1435 = vmatmul.mubr.bf16.gmra.mrb[0].mxu0 %v1369
        %v1436 = vpop.f32.mrb[0].mxu0
        %v1437 = vadd.f32 %v1360, %v1436
        %v1438 = vpop.f32.mrb[0].mxu0
        %v1439 = vpop.f32.mrb[0].mxu0
        %v1440 = vadd.f32 %v1360, %v1439
        %v1441 = vpop.f32.mrb[0].mxu0
        %1442 = vmatprep.mubr.bf16.mxu0 0
        %1443 = vmatmul.mubr.bf16.gmra.mrb[0].mxu0 %v1372
        %v1444 = vpop.f32.mrb[0].mxu0
        %v1445 = vadd.f32 %v1360, %v1444
        %v1446 = vpop.f32.mrb[0].mxu0
        %v1447 = vpop.f32.mrb[0].mxu0
        %v1448 = vadd.f32 %v1360, %v1447
        %v1449 = vpop.f32.mrb[0].mxu0
        %1450 = vmatprep.mubr.bf16.mxu0 0
        %1451 = vmatmul.mubr.bf16.gmra.mrb[0].mxu0 %v1375
        %v1452 = vpop.f32.mrb[0].mxu0
        %v1453 = vadd.f32 %v1360, %v1452
        %v1454 = vpop.f32.mrb[0].mxu0
        %v1455 = vpop.f32.mrb[0].mxu0
        %v1456 = vadd.f32 %v1360, %v1455
        %v1457 = vpop.f32.mrb[0].mxu0
        %1458 = vmatprep.mubr.bf16.mxu0 0
        %1459 = vmatmul.mubr.bf16.gmra.mrb[0].mxu0 %v1378
        %v1460 = vpop.f32.mrb[0].mxu0
        %v1461 = vadd.f32 %v1360, %v1460
        %v1462 = vpop.f32.mrb[0].mxu0
        %v1463 = vpop.f32.mrb[0].mxu0
        %v1464 = vadd.f32 %v1360, %v1463
        %v1465 = vpop.f32.mrb[0].mxu0
        %1466 = vmatprep.mubr.bf16.mxu0 0
        %1467 = vmatmul.mubr.bf16.gmra.mrb[0].mxu0 %v1381
        %v1468 = vpop.f32.mrb[0].mxu0
        %v1469 = vadd.f32 %v1360, %v1468
        %v1470 = vpop.f32.mrb[0].mxu0
        %v1471 = vpop.f32.mrb[0].mxu0
        %v1472 = vadd.f32 %v1360, %v1471
        %v1473 = vpop.f32.mrb[0].mxu0
        %1474 = vmatprep.mubr.bf16.mxu0 0
        %1475 = vmatmul.mubr.bf16.gmra.mrb[0].mxu0 %v1384
        %v1476 = vpop.f32.mrb[0].mxu0
        %v1477 = vadd.f32 %v1360, %v1476
        %v1478 = vpop.f32.mrb[0].mxu0
        %v1479 = vpop.f32.mrb[0].mxu0
        %v1480 = vadd.f32 %v1360, %v1479
        %v1481 = vpop.f32.mrb[0].mxu0
        %1482 = vdwg.mxu0
        %s1483 = smul.u32 0, 16
        %s1484 = scalar_lea.vmem %s242, %s1483 [#allocation6]
        %1485 = vst [vmem:[%s1484] sm:$0xff] %v1421
        %1486 = vst [vmem:[%s1484 + $0x8] sm:$0xff] %v1424
        %1487 = vst [vmem:[%s1484 + $0x10] sm:$0xff] %v1429
        %1488 = vst [vmem:[%s1484 + $0x18] sm:$0xff] %v1432
        %1489 = vst [vmem:[%s1484 + $0x20] sm:$0xff] %v1437
        %1490 = vst [vmem:[%s1484 + $0x28] sm:$0xff] %v1440
        %1491 = vst [vmem:[%s1484 + $0x30] sm:$0xff] %v1445
        %1492 = vst [vmem:[%s1484 + $0x38] sm:$0xff] %v1448
        %1493 = vst [vmem:[%s1484 + $0x40] sm:$0xff] %v1453
        %1494 = vst [vmem:[%s1484 + $0x48] sm:$0xff] %v1456
        %1495 = vst [vmem:[%s1484 + $0x50] sm:$0xff] %v1461
        %1496 = vst [vmem:[%s1484 + $0x58] sm:$0xff] %v1464
        %1497 = vst [vmem:[%s1484 + $0x60] sm:$0xff] %v1469
        %1498 = vst [vmem:[%s1484 + $0x68] sm:$0xff] %v1472
        %1499 = vst [vmem:[%s1484 + $0x70] sm:$0xff] %v1477
        %1500 = vst [vmem:[%s1484 + $0x78] sm:$0xff] %v1480
        %s1501 = smul.u32 8, 24
        %s1502 = scalar_lea.vmem [#allocation2], %s1501
        %v1503 = vld [vmem:[%s1502] sm:$0xff]
        %v1504 = vld [vmem:[%s1502 + $0x8] sm:$0xff]
        %v1505 = vld [vmem:[%s1502 + $0x10] sm:$0x3]
        %v1506 = vld [vmem:[%s1502 + $0x18] sm:$0xff]
        %v1507 = vld [vmem:[%s1502 + $0x20] sm:$0xff]
        %v1508 = vld [vmem:[%s1502 + $0x28] sm:$0x3]
        %v1509 = vld [vmem:[%s1502 + $0x30] sm:$0xff]
        %v1510 = vld [vmem:[%s1502 + $0x38] sm:$0xff]
        %v1511 = vld [vmem:[%s1502 + $0x40] sm:$0x3]
        %v1512 = vld [vmem:[%s1502 + $0x48] sm:$0xff]
        %v1513 = vld [vmem:[%s1502 + $0x50] sm:$0xff]
        %v1514 = vld [vmem:[%s1502 + $0x58] sm:$0x3]
        %v1515 = vld [vmem:[%s1502 + $0x60] sm:$0xff]
        %v1516 = vld [vmem:[%s1502 + $0x68] sm:$0xff]
        %v1517 = vld [vmem:[%s1502 + $0x70] sm:$0x3]
        %v1518 = vld [vmem:[%s1502 + $0x78] sm:$0xff]
        %v1519 = vld [vmem:[%s1502 + $0x80] sm:$0xff]
        %v1520 = vld [vmem:[%s1502 + $0x88] sm:$0x3]
        %v1521 = vld [vmem:[%s1502 + $0x90] sm:$0xff]
        %v1522 = vld [vmem:[%s1502 + $0x98] sm:$0xff]
        %v1523 = vld [vmem:[%s1502 + $0xa0] sm:$0x3]
        %v1524 = vld [vmem:[%s1502 + $0xa8] sm:$0xff]
        %v1525 = vld [vmem:[%s1502 + $0xb0] sm:$0xff]
        %v1526 = vld [vmem:[%s1502 + $0xb8] sm:$0x3]
        %v1527 = vmul.f32 %v1503, %v404
        %v1528 = vmul.f32 %v1504, %v404
        %v1529 = vmul.f32 %v1506, %v404
        %v1530 = vmul.f32 %v1507, %v404
        %v1531 = vmul.f32 %v1509, %v404
        %v1532 = vmul.f32 %v1510, %v404
        %v1533 = vmul.f32 %v1512, %v404
        %v1534 = vmul.f32 %v1513, %v404
        %v1535 = vmul.f32 %v1515, %v404
        %v1536 = vmul.f32 %v1516, %v404
        %v1537 = vmul.f32 %v1518, %v404
        %v1538 = vmul.f32 %v1519, %v404
        %v1539 = vmul.f32 %v1521, %v404
        %v1540 = vmul.f32 %v1522, %v404
        %v1541 = vmul.f32 %v1524, %v404
        %v1542 = vmul.f32 %v1525, %v404
        %v1543 = vadd.f32 %v1527, 0.0
        %v1544 = vadd.f32 %v1528, 0.0
        %v1545 = vadd.f32 %v1529, 0.0
        %v1546 = vadd.f32 %v1530, 0.0
        %v1547 = vadd.f32 %v1531, 0.0
        %v1548 = vadd.f32 %v1532, 0.0
        %v1549 = vadd.f32 %v1533, 0.0
        %v1550 = vadd.f32 %v1534, 0.0
        %v1551 = vadd.f32 %v1535, 0.0
        %v1552 = vadd.f32 %v1536, 0.0
        %v1553 = vadd.f32 %v1537, 0.0
        %v1554 = vadd.f32 %v1538, 0.0
        %v1555 = vadd.f32 %v1539, 0.0
        %v1556 = vadd.f32 %v1540, 0.0
        %v1557 = vadd.f32 %v1541, 0.0
        %v1558 = vadd.f32 %v1542, 0.0
        %v1559 = vmul.f32 %v1503, %v442
        %v1560 = vmul.f32 %v1504, %v442
        %v1561 = vmul.f32 %v1505, %v442
        %v1562 = vmul.f32 %v1506, %v442
        %v1563 = vmul.f32 %v1507, %v442
        %v1564 = vmul.f32 %v1508, %v442
        %v1565 = vmul.f32 %v1509, %v442
        %v1566 = vmul.f32 %v1510, %v442
        %v1567 = vmul.f32 %v1511, %v442
        %v1568 = vmul.f32 %v1512, %v442
        %v1569 = vmul.f32 %v1513, %v442
        %v1570 = vmul.f32 %v1514, %v442
        %v1571 = vmul.f32 %v1515, %v442
        %v1572 = vmul.f32 %v1516, %v442
        %v1573 = vmul.f32 %v1517, %v442
        %v1574 = vmul.f32 %v1518, %v442
        %v1575 = vmul.f32 %v1519, %v442
        %v1576 = vmul.f32 %v1520, %v442
        %v1577 = vmul.f32 %v1521, %v442
        %v1578 = vmul.f32 %v1522, %v442
        %v1579 = vmul.f32 %v1523, %v442
        %v1580 = vmul.f32 %v1524, %v442
        %v1581 = vmul.f32 %v1525, %v442
        %v1582 = vmul.f32 %v1526, %v442
        %v1607 = vrot.slane %v1559, 1
        %v1608 = vrot.slane %v1560, 1
        %v1609 = vsel %vm492, %v1607, %v1608
        %v1610 = vrot.slane %v1561, 1
        %v1611 = vsel %vm492, %v1608, %v1610
        %v1612 = vrot.slane %v1562, 1
        %v1613 = vrot.slane %v1563, 1
        %v1614 = vsel %vm492, %v1612, %v1613
        %v1615 = vrot.slane %v1564, 1
        %v1616 = vsel %vm492, %v1613, %v1615
        %v1617 = vrot.slane %v1565, 1
        %v1618 = vrot.slane %v1566, 1
        %v1619 = vsel %vm492, %v1617, %v1618
        %v1620 = vrot.slane %v1567, 1
        %v1621 = vsel %vm492, %v1618, %v1620
        %v1622 = vrot.slane %v1568, 1
        %v1623 = vrot.slane %v1569, 1
        %v1624 = vsel %vm492, %v1622, %v1623
        %v1625 = vrot.slane %v1570, 1
        %v1626 = vsel %vm492, %v1623, %v1625
        %v1627 = vrot.slane %v1571, 1
        %v1628 = vrot.slane %v1572, 1
        %v1629 = vsel %vm492, %v1627, %v1628
        %v1630 = vrot.slane %v1573, 1
        %v1631 = vsel %vm492, %v1628, %v1630
        %v1632 = vrot.slane %v1574, 1
        %v1633 = vrot.slane %v1575, 1
        %v1634 = vsel %vm492, %v1632, %v1633
        %v1635 = vrot.slane %v1576, 1
        %v1636 = vsel %vm492, %v1633, %v1635
        %v1637 = vrot.slane %v1577, 1
        %v1638 = vrot.slane %v1578, 1
        %v1639 = vsel %vm492, %v1637, %v1638
        %v1640 = vrot.slane %v1579, 1
        %v1641 = vsel %vm492, %v1638, %v1640
        %v1642 = vrot.slane %v1580, 1
        %v1643 = vrot.slane %v1581, 1
        %v1644 = vsel %vm492, %v1642, %v1643
        %v1645 = vrot.slane %v1582, 1
        %v1646 = vsel %vm492, %v1643, %v1645
        %v1663 = vadd.f32 %v1543, %v1609
        %v1664 = vadd.f32 %v1544, %v1611
        %v1665 = vadd.f32 %v1545, %v1614
        %v1666 = vadd.f32 %v1546, %v1616
        %v1667 = vadd.f32 %v1547, %v1619
        %v1668 = vadd.f32 %v1548, %v1621
        %v1669 = vadd.f32 %v1549, %v1624
        %v1670 = vadd.f32 %v1550, %v1626
        %v1671 = vadd.f32 %v1551, %v1629
        %v1672 = vadd.f32 %v1552, %v1631
        %v1673 = vadd.f32 %v1553, %v1634
        %v1674 = vadd.f32 %v1554, %v1636
        %v1675 = vadd.f32 %v1555, %v1639
        %v1676 = vadd.f32 %v1556, %v1641
        %v1677 = vadd.f32 %v1557, %v1644
        %v1678 = vadd.f32 %v1558, %v1646
        %v1679 = vmul.f32 %v1503, %v569
        %v1680 = vmul.f32 %v1504, %v569
        %v1681 = vmul.f32 %v1505, %v569
        %v1682 = vmul.f32 %v1506, %v569
        %v1683 = vmul.f32 %v1507, %v569
        %v1684 = vmul.f32 %v1508, %v569
        %v1685 = vmul.f32 %v1509, %v569
        %v1686 = vmul.f32 %v1510, %v569
        %v1687 = vmul.f32 %v1511, %v569
        %v1688 = vmul.f32 %v1512, %v569
        %v1689 = vmul.f32 %v1513, %v569
        %v1690 = vmul.f32 %v1514, %v569
        %v1691 = vmul.f32 %v1515, %v569
        %v1692 = vmul.f32 %v1516, %v569
        %v1693 = vmul.f32 %v1517, %v569
        %v1694 = vmul.f32 %v1518, %v569
        %v1695 = vmul.f32 %v1519, %v569
        %v1696 = vmul.f32 %v1520, %v569
        %v1697 = vmul.f32 %v1521, %v569
        %v1698 = vmul.f32 %v1522, %v569
        %v1699 = vmul.f32 %v1523, %v569
        %v1700 = vmul.f32 %v1524, %v569
        %v1701 = vmul.f32 %v1525, %v569
        %v1702 = vmul.f32 %v1526, %v569
        %v1727 = vrot.slane %v1679, 2
        %v1728 = vrot.slane %v1680, 2
        %v1729 = vsel %vm619, %v1727, %v1728
        %v1730 = vrot.slane %v1681, 2
        %v1731 = vsel %vm619, %v1728, %v1730
        %v1732 = vrot.slane %v1682, 2
        %v1733 = vrot.slane %v1683, 2
        %v1734 = vsel %vm619, %v1732, %v1733
        %v1735 = vrot.slane %v1684, 2
        %v1736 = vsel %vm619, %v1733, %v1735
        %v1737 = vrot.slane %v1685, 2
        %v1738 = vrot.slane %v1686, 2
        %v1739 = vsel %vm619, %v1737, %v1738
        %v1740 = vrot.slane %v1687, 2
        %v1741 = vsel %vm619, %v1738, %v1740
        %v1742 = vrot.slane %v1688, 2
        %v1743 = vrot.slane %v1689, 2
        %v1744 = vsel %vm619, %v1742, %v1743
        %v1745 = vrot.slane %v1690, 2
        %v1746 = vsel %vm619, %v1743, %v1745
        %v1747 = vrot.slane %v1691, 2
        %v1748 = vrot.slane %v1692, 2
        %v1749 = vsel %vm619, %v1747, %v1748
        %v1750 = vrot.slane %v1693, 2
        %v1751 = vsel %vm619, %v1748, %v1750
        %v1752 = vrot.slane %v1694, 2
        %v1753 = vrot.slane %v1695, 2
        %v1754 = vsel %vm619, %v1752, %v1753
        %v1755 = vrot.slane %v1696, 2
        %v1756 = vsel %vm619, %v1753, %v1755
        %v1757 = vrot.slane %v1697, 2
        %v1758 = vrot.slane %v1698, 2
        %v1759 = vsel %vm619, %v1757, %v1758
        %v1760 = vrot.slane %v1699, 2
        %v1761 = vsel %vm619, %v1758, %v1760
        %v1762 = vrot.slane %v1700, 2
        %v1763 = vrot.slane %v1701, 2
        %v1764 = vsel %vm619, %v1762, %v1763
        %v1765 = vrot.slane %v1702, 2
        %v1766 = vsel %vm619, %v1763, %v1765
        %v1783 = vadd.f32 %v1663, %v1729
        %v1784 = vadd.f32 %v1664, %v1731
        %v1785 = vadd.f32 %v1665, %v1734
        %v1786 = vadd.f32 %v1666, %v1736
        %v1787 = vadd.f32 %v1667, %v1739
        %v1788 = vadd.f32 %v1668, %v1741
        %v1789 = vadd.f32 %v1669, %v1744
        %v1790 = vadd.f32 %v1670, %v1746
        %v1791 = vadd.f32 %v1671, %v1749
        %v1792 = vadd.f32 %v1672, %v1751
        %v1793 = vadd.f32 %v1673, %v1754
        %v1794 = vadd.f32 %v1674, %v1756
        %v1795 = vadd.f32 %v1675, %v1759
        %v1796 = vadd.f32 %v1676, %v1761
        %v1797 = vadd.f32 %v1677, %v1764
        %v1798 = vadd.f32 %v1678, %v1766
        %s1799 = sadd.s32 8, 1
        %s1800 = smul.u32 %s1799, 24
        %s1801 = scalar_lea.vmem [#allocation2], %s1800
        %v1802 = vld [vmem:[%s1801] sm:$0xff]
        %v1803 = vld [vmem:[%s1801 + $0x8] sm:$0xff]
        %v1804 = vld [vmem:[%s1801 + $0x10] sm:$0x3]
        %v1805 = vld [vmem:[%s1801 + $0x18] sm:$0xff]
        %v1806 = vld [vmem:[%s1801 + $0x20] sm:$0xff]
        %v1807 = vld [vmem:[%s1801 + $0x28] sm:$0x3]
        %v1808 = vld [vmem:[%s1801 + $0x30] sm:$0xff]
        %v1809 = vld [vmem:[%s1801 + $0x38] sm:$0xff]
        %v1810 = vld [vmem:[%s1801 + $0x40] sm:$0x3]
        %v1811 = vld [vmem:[%s1801 + $0x48] sm:$0xff]
        %v1812 = vld [vmem:[%s1801 + $0x50] sm:$0xff]
        %v1813 = vld [vmem:[%s1801 + $0x58] sm:$0x3]
        %v1814 = vld [vmem:[%s1801 + $0x60] sm:$0xff]
        %v1815 = vld [vmem:[%s1801 + $0x68] sm:$0xff]
        %v1816 = vld [vmem:[%s1801 + $0x70] sm:$0x3]
        %v1817 = vld [vmem:[%s1801 + $0x78] sm:$0xff]
        %v1818 = vld [vmem:[%s1801 + $0x80] sm:$0xff]
        %v1819 = vld [vmem:[%s1801 + $0x88] sm:$0x3]
        %v1820 = vld [vmem:[%s1801 + $0x90] sm:$0xff]
        %v1821 = vld [vmem:[%s1801 + $0x98] sm:$0xff]
        %v1822 = vld [vmem:[%s1801 + $0xa0] sm:$0x3]
        %v1823 = vld [vmem:[%s1801 + $0xa8] sm:$0xff]
        %v1824 = vld [vmem:[%s1801 + $0xb0] sm:$0xff]
        %v1825 = vld [vmem:[%s1801 + $0xb8] sm:$0x3]
        %v1826 = vmul.f32 %v1802, %v723
        %v1827 = vmul.f32 %v1803, %v723
        %v1828 = vmul.f32 %v1805, %v723
        %v1829 = vmul.f32 %v1806, %v723
        %v1830 = vmul.f32 %v1808, %v723
        %v1831 = vmul.f32 %v1809, %v723
        %v1832 = vmul.f32 %v1811, %v723
        %v1833 = vmul.f32 %v1812, %v723
        %v1834 = vmul.f32 %v1814, %v723
        %v1835 = vmul.f32 %v1815, %v723
        %v1836 = vmul.f32 %v1817, %v723
        %v1837 = vmul.f32 %v1818, %v723
        %v1838 = vmul.f32 %v1820, %v723
        %v1839 = vmul.f32 %v1821, %v723
        %v1840 = vmul.f32 %v1823, %v723
        %v1841 = vmul.f32 %v1824, %v723
        %v1842 = vadd.f32 %v1783, %v1826
        %v1843 = vadd.f32 %v1784, %v1827
        %v1844 = vadd.f32 %v1785, %v1828
        %v1845 = vadd.f32 %v1786, %v1829
        %v1846 = vadd.f32 %v1787, %v1830
        %v1847 = vadd.f32 %v1788, %v1831
        %v1848 = vadd.f32 %v1789, %v1832
        %v1849 = vadd.f32 %v1790, %v1833
        %v1850 = vadd.f32 %v1791, %v1834
        %v1851 = vadd.f32 %v1792, %v1835
        %v1852 = vadd.f32 %v1793, %v1836
        %v1853 = vadd.f32 %v1794, %v1837
        %v1854 = vadd.f32 %v1795, %v1838
        %v1855 = vadd.f32 %v1796, %v1839
        %v1856 = vadd.f32 %v1797, %v1840
        %v1857 = vadd.f32 %v1798, %v1841
        %v1858 = vmul.f32 %v1802, %v761
        %v1859 = vmul.f32 %v1803, %v761
        %v1860 = vmul.f32 %v1804, %v761
        %v1861 = vmul.f32 %v1805, %v761
        %v1862 = vmul.f32 %v1806, %v761
        %v1863 = vmul.f32 %v1807, %v761
        %v1864 = vmul.f32 %v1808, %v761
        %v1865 = vmul.f32 %v1809, %v761
        %v1866 = vmul.f32 %v1810, %v761
        %v1867 = vmul.f32 %v1811, %v761
        %v1868 = vmul.f32 %v1812, %v761
        %v1869 = vmul.f32 %v1813, %v761
        %v1870 = vmul.f32 %v1814, %v761
        %v1871 = vmul.f32 %v1815, %v761
        %v1872 = vmul.f32 %v1816, %v761
        %v1873 = vmul.f32 %v1817, %v761
        %v1874 = vmul.f32 %v1818, %v761
        %v1875 = vmul.f32 %v1819, %v761
        %v1876 = vmul.f32 %v1820, %v761
        %v1877 = vmul.f32 %v1821, %v761
        %v1878 = vmul.f32 %v1822, %v761
        %v1879 = vmul.f32 %v1823, %v761
        %v1880 = vmul.f32 %v1824, %v761
        %v1881 = vmul.f32 %v1825, %v761
        %v1906 = vrot.slane %v1858, 1
        %v1907 = vrot.slane %v1859, 1
        %v1908 = vsel %vm492, %v1906, %v1907
        %v1909 = vrot.slane %v1860, 1
        %v1910 = vsel %vm492, %v1907, %v1909
        %v1911 = vrot.slane %v1861, 1
        %v1912 = vrot.slane %v1862, 1
        %v1913 = vsel %vm492, %v1911, %v1912
        %v1914 = vrot.slane %v1863, 1
        %v1915 = vsel %vm492, %v1912, %v1914
        %v1916 = vrot.slane %v1864, 1
        %v1917 = vrot.slane %v1865, 1
        %v1918 = vsel %vm492, %v1916, %v1917
        %v1919 = vrot.slane %v1866, 1
        %v1920 = vsel %vm492, %v1917, %v1919
        %v1921 = vrot.slane %v1867, 1
        %v1922 = vrot.slane %v1868, 1
        %v1923 = vsel %vm492, %v1921, %v1922
        %v1924 = vrot.slane %v1869, 1
        %v1925 = vsel %vm492, %v1922, %v1924
        %v1926 = vrot.slane %v1870, 1
        %v1927 = vrot.slane %v1871, 1
        %v1928 = vsel %vm492, %v1926, %v1927
        %v1929 = vrot.slane %v1872, 1
        %v1930 = vsel %vm492, %v1927, %v1929
        %v1931 = vrot.slane %v1873, 1
        %v1932 = vrot.slane %v1874, 1
        %v1933 = vsel %vm492, %v1931, %v1932
        %v1934 = vrot.slane %v1875, 1
        %v1935 = vsel %vm492, %v1932, %v1934
        %v1936 = vrot.slane %v1876, 1
        %v1937 = vrot.slane %v1877, 1
        %v1938 = vsel %vm492, %v1936, %v1937
        %v1939 = vrot.slane %v1878, 1
        %v1940 = vsel %vm492, %v1937, %v1939
        %v1941 = vrot.slane %v1879, 1
        %v1942 = vrot.slane %v1880, 1
        %v1943 = vsel %vm492, %v1941, %v1942
        %v1944 = vrot.slane %v1881, 1
        %v1945 = vsel %vm492, %v1942, %v1944
        %v1962 = vadd.f32 %v1842, %v1908
        %v1963 = vadd.f32 %v1843, %v1910
        %v1964 = vadd.f32 %v1844, %v1913
        %v1965 = vadd.f32 %v1845, %v1915
        %v1966 = vadd.f32 %v1846, %v1918
        %v1967 = vadd.f32 %v1847, %v1920
        %v1968 = vadd.f32 %v1848, %v1923
        %v1969 = vadd.f32 %v1849, %v1925
        %v1970 = vadd.f32 %v1850, %v1928
        %v1971 = vadd.f32 %v1851, %v1930
        %v1972 = vadd.f32 %v1852, %v1933
        %v1973 = vadd.f32 %v1853, %v1935
        %v1974 = vadd.f32 %v1854, %v1938
        %v1975 = vadd.f32 %v1855, %v1940
        %v1976 = vadd.f32 %v1856, %v1943
        %v1977 = vadd.f32 %v1857, %v1945
        %v1978 = vmul.f32 %v1802, %v887
        %v1979 = vmul.f32 %v1803, %v887
        %v1980 = vmul.f32 %v1804, %v887
        %v1981 = vmul.f32 %v1805, %v887
        %v1982 = vmul.f32 %v1806, %v887
        %v1983 = vmul.f32 %v1807, %v887
        %v1984 = vmul.f32 %v1808, %v887
        %v1985 = vmul.f32 %v1809, %v887
        %v1986 = vmul.f32 %v1810, %v887
        %v1987 = vmul.f32 %v1811, %v887
        %v1988 = vmul.f32 %v1812, %v887
        %v1989 = vmul.f32 %v1813, %v887
        %v1990 = vmul.f32 %v1814, %v887
        %v1991 = vmul.f32 %v1815, %v887
        %v1992 = vmul.f32 %v1816, %v887
        %v1993 = vmul.f32 %v1817, %v887
        %v1994 = vmul.f32 %v1818, %v887
        %v1995 = vmul.f32 %v1819, %v887
        %v1996 = vmul.f32 %v1820, %v887
        %v1997 = vmul.f32 %v1821, %v887
        %v1998 = vmul.f32 %v1822, %v887
        %v1999 = vmul.f32 %v1823, %v887
        %v2000 = vmul.f32 %v1824, %v887
        %v2001 = vmul.f32 %v1825, %v887
        %v2026 = vrot.slane %v1978, 2
        %v2027 = vrot.slane %v1979, 2
        %v2028 = vsel %vm619, %v2026, %v2027
        %v2029 = vrot.slane %v1980, 2
        %v2030 = vsel %vm619, %v2027, %v2029
        %v2031 = vrot.slane %v1981, 2
        %v2032 = vrot.slane %v1982, 2
        %v2033 = vsel %vm619, %v2031, %v2032
        %v2034 = vrot.slane %v1983, 2
        %v2035 = vsel %vm619, %v2032, %v2034
        %v2036 = vrot.slane %v1984, 2
        %v2037 = vrot.slane %v1985, 2
        %v2038 = vsel %vm619, %v2036, %v2037
        %v2039 = vrot.slane %v1986, 2
        %v2040 = vsel %vm619, %v2037, %v2039
        %v2041 = vrot.slane %v1987, 2
        %v2042 = vrot.slane %v1988, 2
        %v2043 = vsel %vm619, %v2041, %v2042
        %v2044 = vrot.slane %v1989, 2
        %v2045 = vsel %vm619, %v2042, %v2044
        %v2046 = vrot.slane %v1990, 2
        %v2047 = vrot.slane %v1991, 2
        %v2048 = vsel %vm619, %v2046, %v2047
        %v2049 = vrot.slane %v1992, 2
        %v2050 = vsel %vm619, %v2047, %v2049
        %v2051 = vrot.slane %v1993, 2
        %v2052 = vrot.slane %v1994, 2
        %v2053 = vsel %vm619, %v2051, %v2052
        %v2054 = vrot.slane %v1995, 2
        %v2055 = vsel %vm619, %v2052, %v2054
        %v2056 = vrot.slane %v1996, 2
        %v2057 = vrot.slane %v1997, 2
        %v2058 = vsel %vm619, %v2056, %v2057
        %v2059 = vrot.slane %v1998, 2
        %v2060 = vsel %vm619, %v2057, %v2059
        %v2061 = vrot.slane %v1999, 2
        %v2062 = vrot.slane %v2000, 2
        %v2063 = vsel %vm619, %v2061, %v2062
        %v2064 = vrot.slane %v2001, 2
        %v2065 = vsel %vm619, %v2062, %v2064
        %v2082 = vadd.f32 %v1962, %v2028
        %v2083 = vadd.f32 %v1963, %v2030
        %v2084 = vadd.f32 %v1964, %v2033
        %v2085 = vadd.f32 %v1965, %v2035
        %v2086 = vadd.f32 %v1966, %v2038
        %v2087 = vadd.f32 %v1967, %v2040
        %v2088 = vadd.f32 %v1968, %v2043
        %v2089 = vadd.f32 %v1969, %v2045
        %v2090 = vadd.f32 %v1970, %v2048
        %v2091 = vadd.f32 %v1971, %v2050
        %v2092 = vadd.f32 %v1972, %v2053
        %v2093 = vadd.f32 %v1973, %v2055
        %v2094 = vadd.f32 %v1974, %v2058
        %v2095 = vadd.f32 %v1975, %v2060
        %v2096 = vadd.f32 %v1976, %v2063
        %v2097 = vadd.f32 %v1977, %v2065
        %s2098 = sadd.s32 8, 2
        %s2099 = smul.u32 %s2098, 24
        %s2100 = scalar_lea.vmem [#allocation2], %s2099
        %v2101 = vld [vmem:[%s2100] sm:$0xff]
        %v2102 = vld [vmem:[%s2100 + $0x8] sm:$0xff]
        %v2103 = vld [vmem:[%s2100 + $0x10] sm:$0x3]
        %v2104 = vld [vmem:[%s2100 + $0x18] sm:$0xff]
        %v2105 = vld [vmem:[%s2100 + $0x20] sm:$0xff]
        %v2106 = vld [vmem:[%s2100 + $0x28] sm:$0x3]
        %v2107 = vld [vmem:[%s2100 + $0x30] sm:$0xff]
        %v2108 = vld [vmem:[%s2100 + $0x38] sm:$0xff]
        %v2109 = vld [vmem:[%s2100 + $0x40] sm:$0x3]
        %v2110 = vld [vmem:[%s2100 + $0x48] sm:$0xff]
        %v2111 = vld [vmem:[%s2100 + $0x50] sm:$0xff]
        %v2112 = vld [vmem:[%s2100 + $0x58] sm:$0x3]
        %v2113 = vld [vmem:[%s2100 + $0x60] sm:$0xff]
        %v2114 = vld [vmem:[%s2100 + $0x68] sm:$0xff]
        %v2115 = vld [vmem:[%s2100 + $0x70] sm:$0x3]
        %v2116 = vld [vmem:[%s2100 + $0x78] sm:$0xff]
        %v2117 = vld [vmem:[%s2100 + $0x80] sm:$0xff]
        %v2118 = vld [vmem:[%s2100 + $0x88] sm:$0x3]
        %v2119 = vld [vmem:[%s2100 + $0x90] sm:$0xff]
        %v2120 = vld [vmem:[%s2100 + $0x98] sm:$0xff]
        %v2121 = vld [vmem:[%s2100 + $0xa0] sm:$0x3]
        %v2122 = vld [vmem:[%s2100 + $0xa8] sm:$0xff]
        %v2123 = vld [vmem:[%s2100 + $0xb0] sm:$0xff]
        %v2124 = vld [vmem:[%s2100 + $0xb8] sm:$0x3]
        %v2125 = vmul.f32 %v2101, %v1040
        %v2126 = vmul.f32 %v2102, %v1040
        %v2127 = vmul.f32 %v2104, %v1040
        %v2128 = vmul.f32 %v2105, %v1040
        %v2129 = vmul.f32 %v2107, %v1040
        %v2130 = vmul.f32 %v2108, %v1040
        %v2131 = vmul.f32 %v2110, %v1040
        %v2132 = vmul.f32 %v2111, %v1040
        %v2133 = vmul.f32 %v2113, %v1040
        %v2134 = vmul.f32 %v2114, %v1040
        %v2135 = vmul.f32 %v2116, %v1040
        %v2136 = vmul.f32 %v2117, %v1040
        %v2137 = vmul.f32 %v2119, %v1040
        %v2138 = vmul.f32 %v2120, %v1040
        %v2139 = vmul.f32 %v2122, %v1040
        %v2140 = vmul.f32 %v2123, %v1040
        %v2141 = vadd.f32 %v2082, %v2125
        %v2142 = vadd.f32 %v2083, %v2126
        %v2143 = vadd.f32 %v2084, %v2127
        %v2144 = vadd.f32 %v2085, %v2128
        %v2145 = vadd.f32 %v2086, %v2129
        %v2146 = vadd.f32 %v2087, %v2130
        %v2147 = vadd.f32 %v2088, %v2131
        %v2148 = vadd.f32 %v2089, %v2132
        %v2149 = vadd.f32 %v2090, %v2133
        %v2150 = vadd.f32 %v2091, %v2134
        %v2151 = vadd.f32 %v2092, %v2135
        %v2152 = vadd.f32 %v2093, %v2136
        %v2153 = vadd.f32 %v2094, %v2137
        %v2154 = vadd.f32 %v2095, %v2138
        %v2155 = vadd.f32 %v2096, %v2139
        %v2156 = vadd.f32 %v2097, %v2140
        %v2157 = vmul.f32 %v2101, %v1078
        %v2158 = vmul.f32 %v2102, %v1078
        %v2159 = vmul.f32 %v2103, %v1078
        %v2160 = vmul.f32 %v2104, %v1078
        %v2161 = vmul.f32 %v2105, %v1078
        %v2162 = vmul.f32 %v2106, %v1078
        %v2163 = vmul.f32 %v2107, %v1078
        %v2164 = vmul.f32 %v2108, %v1078
        %v2165 = vmul.f32 %v2109, %v1078
        %v2166 = vmul.f32 %v2110, %v1078
        %v2167 = vmul.f32 %v2111, %v1078
        %v2168 = vmul.f32 %v2112, %v1078
        %v2169 = vmul.f32 %v2113, %v1078
        %v2170 = vmul.f32 %v2114, %v1078
        %v2171 = vmul.f32 %v2115, %v1078
        %v2172 = vmul.f32 %v2116, %v1078
        %v2173 = vmul.f32 %v2117, %v1078
        %v2174 = vmul.f32 %v2118, %v1078
        %v2175 = vmul.f32 %v2119, %v1078
        %v2176 = vmul.f32 %v2120, %v1078
        %v2177 = vmul.f32 %v2121, %v1078
        %v2178 = vmul.f32 %v2122, %v1078
        %v2179 = vmul.f32 %v2123, %v1078
        %v2180 = vmul.f32 %v2124, %v1078
        %v2205 = vrot.slane %v2157, 1
        %v2206 = vrot.slane %v2158, 1
        %v2207 = vsel %vm492, %v2205, %v2206
        %v2208 = vrot.slane %v2159, 1
        %v2209 = vsel %vm492, %v2206, %v2208
        %v2210 = vrot.slane %v2160, 1
        %v2211 = vrot.slane %v2161, 1
        %v2212 = vsel %vm492, %v2210, %v2211
        %v2213 = vrot.slane %v2162, 1
        %v2214 = vsel %vm492, %v2211, %v2213
        %v2215 = vrot.slane %v2163, 1
        %v2216 = vrot.slane %v2164, 1
        %v2217 = vsel %vm492, %v2215, %v2216
        %v2218 = vrot.slane %v2165, 1
        %v2219 = vsel %vm492, %v2216, %v2218
        %v2220 = vrot.slane %v2166, 1
        %v2221 = vrot.slane %v2167, 1
        %v2222 = vsel %vm492, %v2220, %v2221
        %v2223 = vrot.slane %v2168, 1
        %v2224 = vsel %vm492, %v2221, %v2223
        %v2225 = vrot.slane %v2169, 1
        %v2226 = vrot.slane %v2170, 1
        %v2227 = vsel %vm492, %v2225, %v2226
        %v2228 = vrot.slane %v2171, 1
        %v2229 = vsel %vm492, %v2226, %v2228
        %v2230 = vrot.slane %v2172, 1
        %v2231 = vrot.slane %v2173, 1
        %v2232 = vsel %vm492, %v2230, %v2231
        %v2233 = vrot.slane %v2174, 1
        %v2234 = vsel %vm492, %v2231, %v2233
        %v2235 = vrot.slane %v2175, 1
        %v2236 = vrot.slane %v2176, 1
        %v2237 = vsel %vm492, %v2235, %v2236
        %v2238 = vrot.slane %v2177, 1
        %v2239 = vsel %vm492, %v2236, %v2238
        %v2240 = vrot.slane %v2178, 1
        %v2241 = vrot.slane %v2179, 1
        %v2242 = vsel %vm492, %v2240, %v2241
        %v2243 = vrot.slane %v2180, 1
        %v2244 = vsel %vm492, %v2241, %v2243
        %v2261 = vadd.f32 %v2141, %v2207
        %v2262 = vadd.f32 %v2142, %v2209
        %v2263 = vadd.f32 %v2143, %v2212
        %v2264 = vadd.f32 %v2144, %v2214
        %v2265 = vadd.f32 %v2145, %v2217
        %v2266 = vadd.f32 %v2146, %v2219
        %v2267 = vadd.f32 %v2147, %v2222
        %v2268 = vadd.f32 %v2148, %v2224
        %v2269 = vadd.f32 %v2149, %v2227
        %v2270 = vadd.f32 %v2150, %v2229
        %v2271 = vadd.f32 %v2151, %v2232
        %v2272 = vadd.f32 %v2152, %v2234
        %v2273 = vadd.f32 %v2153, %v2237
        %v2274 = vadd.f32 %v2154, %v2239
        %v2275 = vadd.f32 %v2155, %v2242
        %v2276 = vadd.f32 %v2156, %v2244
        %v2277 = vmul.f32 %v2101, %v1204
        %v2278 = vmul.f32 %v2102, %v1204
        %v2279 = vmul.f32 %v2103, %v1204
        %v2280 = vmul.f32 %v2104, %v1204
        %v2281 = vmul.f32 %v2105, %v1204
        %v2282 = vmul.f32 %v2106, %v1204
        %v2283 = vmul.f32 %v2107, %v1204
        %v2284 = vmul.f32 %v2108, %v1204
        %v2285 = vmul.f32 %v2109, %v1204
        %v2286 = vmul.f32 %v2110, %v1204
        %v2287 = vmul.f32 %v2111, %v1204
        %v2288 = vmul.f32 %v2112, %v1204
        %v2289 = vmul.f32 %v2113, %v1204
        %v2290 = vmul.f32 %v2114, %v1204
        %v2291 = vmul.f32 %v2115, %v1204
        %v2292 = vmul.f32 %v2116, %v1204
        %v2293 = vmul.f32 %v2117, %v1204
        %v2294 = vmul.f32 %v2118, %v1204
        %v2295 = vmul.f32 %v2119, %v1204
        %v2296 = vmul.f32 %v2120, %v1204
        %v2297 = vmul.f32 %v2121, %v1204
        %v2298 = vmul.f32 %v2122, %v1204
        %v2299 = vmul.f32 %v2123, %v1204
        %v2300 = vmul.f32 %v2124, %v1204
        %v2325 = vrot.slane %v2277, 2
        %v2326 = vrot.slane %v2278, 2
        %v2327 = vsel %vm619, %v2325, %v2326
        %v2328 = vrot.slane %v2279, 2
        %v2329 = vsel %vm619, %v2326, %v2328
        %v2330 = vrot.slane %v2280, 2
        %v2331 = vrot.slane %v2281, 2
        %v2332 = vsel %vm619, %v2330, %v2331
        %v2333 = vrot.slane %v2282, 2
        %v2334 = vsel %vm619, %v2331, %v2333
        %v2335 = vrot.slane %v2283, 2
        %v2336 = vrot.slane %v2284, 2
        %v2337 = vsel %vm619, %v2335, %v2336
        %v2338 = vrot.slane %v2285, 2
        %v2339 = vsel %vm619, %v2336, %v2338
        %v2340 = vrot.slane %v2286, 2
        %v2341 = vrot.slane %v2287, 2
        %v2342 = vsel %vm619, %v2340, %v2341
        %v2343 = vrot.slane %v2288, 2
        %v2344 = vsel %vm619, %v2341, %v2343
        %v2345 = vrot.slane %v2289, 2
        %v2346 = vrot.slane %v2290, 2
        %v2347 = vsel %vm619, %v2345, %v2346
        %v2348 = vrot.slane %v2291, 2
        %v2349 = vsel %vm619, %v2346, %v2348
        %v2350 = vrot.slane %v2292, 2
        %v2351 = vrot.slane %v2293, 2
        %v2352 = vsel %vm619, %v2350, %v2351
        %v2353 = vrot.slane %v2294, 2
        %v2354 = vsel %vm619, %v2351, %v2353
        %v2355 = vrot.slane %v2295, 2
        %v2356 = vrot.slane %v2296, 2
        %v2357 = vsel %vm619, %v2355, %v2356
        %v2358 = vrot.slane %v2297, 2
        %v2359 = vsel %vm619, %v2356, %v2358
        %v2360 = vrot.slane %v2298, 2
        %v2361 = vrot.slane %v2299, 2
        %v2362 = vsel %vm619, %v2360, %v2361
        %v2363 = vrot.slane %v2300, 2
        %v2364 = vsel %vm619, %v2361, %v2363
        %v2381 = vadd.f32 %v2261, %v2327
        %v2382 = vadd.f32 %v2262, %v2329
        %v2383 = vadd.f32 %v2263, %v2332
        %v2384 = vadd.f32 %v2264, %v2334
        %v2385 = vadd.f32 %v2265, %v2337
        %v2386 = vadd.f32 %v2266, %v2339
        %v2387 = vadd.f32 %v2267, %v2342
        %v2388 = vadd.f32 %v2268, %v2344
        %v2389 = vadd.f32 %v2269, %v2347
        %v2390 = vadd.f32 %v2270, %v2349
        %v2391 = vadd.f32 %v2271, %v2352
        %v2392 = vadd.f32 %v2272, %v2354
        %v2393 = vadd.f32 %v2273, %v2357
        %v2394 = vadd.f32 %v2274, %v2359
        %v2395 = vadd.f32 %v2275, %v2362
        %v2396 = vadd.f32 %v2276, %v2364
        %v2397 = vadd.f32 %v2381, %v1330
        %v2398 = vadd.f32 %v2382, %v1330
        %v2399 = vadd.f32 %v2383, %v1330
        %v2400 = vadd.f32 %v2384, %v1330
        %v2401 = vadd.f32 %v2385, %v1330
        %v2402 = vadd.f32 %v2386, %v1330
        %v2403 = vadd.f32 %v2387, %v1330
        %v2404 = vadd.f32 %v2388, %v1330
        %v2405 = vadd.f32 %v2389, %v1330
        %v2406 = vadd.f32 %v2390, %v1330
        %v2407 = vadd.f32 %v2391, %v1330
        %v2408 = vadd.f32 %v2392, %v1330
        %v2409 = vadd.f32 %v2393, %v1330
        %v2410 = vadd.f32 %v2394, %v1330
        %v2411 = vadd.f32 %v2395, %v1330
        %v2412 = vadd.f32 %v2396, %v1330
        %v2413 = vpack.c.bf16 %v2398, %v2397
        %v2414 = vpack.c.bf16 %v2400, %v2399
        %v2415 = vpack.c.bf16 %v2402, %v2401
        %v2416 = vpack.c.bf16 %v2404, %v2403
        %v2417 = vpack.c.bf16 %v2406, %v2405
        %v2418 = vpack.c.bf16 %v2408, %v2407
        %v2419 = vpack.c.bf16 %v2410, %v2409
        %v2420 = vpack.c.bf16 %v2412, %v2411
        %v2422 = vsel %vm244, %v2413, 0
        %v2425 = vsel %vm244, %v2414, 0
        %v2428 = vsel %vm244, %v2415, 0
        %v2431 = vsel %vm244, %v2416, 0
        %v2434 = vsel %vm244, %v2417, 0
        %v2437 = vsel %vm244, %v2418, 0
        %v2440 = vsel %vm244, %v2419, 0
        %v2443 = vsel %vm244, %v2420, 0
        %2445 = vmatprep.subr.bf16.mxu0 0
        %2446 = vmatpush1.bf16.msra.mxu0 %v369
        %2447 = vmatprep.subr.bf16.mxu0 0
        %2448 = vmatpush1.bf16.msra.mxu0 %v370
        %2449 = vmatprep.subr.bf16.mxu0 0
        %2450 = vmatpush1.bf16.msra.mxu0 %v371
        %2451 = vmatprep.subr.bf16.mxu0 0
        %2452 = vmatpush1.bf16.msra.mxu0 %v372
        %2453 = vmatprep.subr.bf16.mxu0 0
        %2454 = vmatpush1.bf16.msra.mxu0 0
        %2455 = vmatprep.subr.bf16.mxu0 0
        %2456 = vmatpush1.bf16.msra.mxu0 0
        %2457 = vmatprep.subr.bf16.mxu0 0
        %2458 = vmatpush1.bf16.msra.mxu0 0
        %2459 = vmatprep.subr.bf16.mxu0 0
        %2460 = vmatpush1.bf16.msra.mxu0 0
        %2461 = vmatprep.subr.bf16.mxu0 0
        %2462 = vmatpush1.bf16.msra.mxu0 0
        %2463 = vmatprep.subr.bf16.mxu0 0
        %2464 = vmatpush1.bf16.msra.mxu0 0
        %2465 = vmatprep.subr.bf16.mxu0 0
        %2466 = vmatpush1.bf16.msra.mxu0 0
        %2467 = vmatprep.subr.bf16.mxu0 0
        %2468 = vmatpush1.bf16.msra.mxu0 0
        %2469 = vmatprep.subr.bf16.mxu0 0
        %2470 = vmatpush1.bf16.msra.mxu0 0
        %2471 = vmatprep.subr.bf16.mxu0 0
        %2472 = vmatpush1.bf16.msra.mxu0 0
        %2473 = vmatprep.subr.bf16.mxu0 0
        %2474 = vmatpush1.bf16.msra.mxu0 0
        %2475 = vmatprep.subr.bf16.mxu0 0
        %2476 = vmatpush1.bf16.msra.mxu0 0
        %2477 = vmatprep.mubr.bf16.mxu0 0
        %2478 = vmatmul.mubr.bf16.gmra.mrb[0].mxu0 %v2422
        %v2479 = vpop.f32.mrb[0].mxu0
        %v2480 = vadd.f32 %v1360, %v2479
        %v2481 = vpop.f32.mrb[0].mxu0
        %v2482 = vpop.f32.mrb[0].mxu0
        %v2483 = vadd.f32 %v1360, %v2482
        %v2484 = vpop.f32.mrb[0].mxu0
        %2485 = vmatprep.mubr.bf16.mxu0 0
        %2486 = vmatmul.mubr.bf16.gmra.mrb[0].mxu0 %v2425
        %v2487 = vpop.f32.mrb[0].mxu0
        %v2488 = vadd.f32 %v1360, %v2487
        %v2489 = vpop.f32.mrb[0].mxu0
        %v2490 = vpop.f32.mrb[0].mxu0
        %v2491 = vadd.f32 %v1360, %v2490
        %v2492 = vpop.f32.mrb[0].mxu0
        %2493 = vmatprep.mubr.bf16.mxu0 0
        %2494 = vmatmul.mubr.bf16.gmra.mrb[0].mxu0 %v2428
        %v2495 = vpop.f32.mrb[0].mxu0
        %v2496 = vadd.f32 %v1360, %v2495
        %v2497 = vpop.f32.mrb[0].mxu0
        %v2498 = vpop.f32.mrb[0].mxu0
        %v2499 = vadd.f32 %v1360, %v2498
        %v2500 = vpop.f32.mrb[0].mxu0
        %2501 = vmatprep.mubr.bf16.mxu0 0
        %2502 = vmatmul.mubr.bf16.gmra.mrb[0].mxu0 %v2431
        %v2503 = vpop.f32.mrb[0].mxu0
        %v2504 = vadd.f32 %v1360, %v2503
        %v2505 = vpop.f32.mrb[0].mxu0
        %v2506 = vpop.f32.mrb[0].mxu0
        %v2507 = vadd.f32 %v1360, %v2506
        %v2508 = vpop.f32.mrb[0].mxu0
        %2509 = vmatprep.mubr.bf16.mxu0 0
        %2510 = vmatmul.mubr.bf16.gmra.mrb[0].mxu0 %v2434
        %v2511 = vpop.f32.mrb[0].mxu0
        %v2512 = vadd.f32 %v1360, %v2511
        %v2513 = vpop.f32.mrb[0].mxu0
        %v2514 = vpop.f32.mrb[0].mxu0
        %v2515 = vadd.f32 %v1360, %v2514
        %v2516 = vpop.f32.mrb[0].mxu0
        %2517 = vmatprep.mubr.bf16.mxu0 0
        %2518 = vmatmul.mubr.bf16.gmra.mrb[0].mxu0 %v2437
        %v2519 = vpop.f32.mrb[0].mxu0
        %v2520 = vadd.f32 %v1360, %v2519
        %v2521 = vpop.f32.mrb[0].mxu0
        %v2522 = vpop.f32.mrb[0].mxu0
        %v2523 = vadd.f32 %v1360, %v2522
        %v2524 = vpop.f32.mrb[0].mxu0
        %2525 = vmatprep.mubr.bf16.mxu0 0
        %2526 = vmatmul.mubr.bf16.gmra.mrb[0].mxu0 %v2440
        %v2527 = vpop.f32.mrb[0].mxu0
        %v2528 = vadd.f32 %v1360, %v2527
        %v2529 = vpop.f32.mrb[0].mxu0
        %v2530 = vpop.f32.mrb[0].mxu0
        %v2531 = vadd.f32 %v1360, %v2530
        %v2532 = vpop.f32.mrb[0].mxu0
        %2533 = vmatprep.mubr.bf16.mxu0 0
        %2534 = vmatmul.mubr.bf16.gmra.mrb[0].mxu0 %v2443
        %v2535 = vpop.f32.mrb[0].mxu0
        %v2536 = vadd.f32 %v1360, %v2535
        %v2537 = vpop.f32.mrb[0].mxu0
        %v2538 = vpop.f32.mrb[0].mxu0
        %v2539 = vadd.f32 %v1360, %v2538
        %v2540 = vpop.f32.mrb[0].mxu0
        %2541 = vdwg.mxu0
        %s2542 = smul.u32 8, 16
        %s2543 = scalar_lea.vmem %s242, %s2542 [#allocation6]
        %2544 = vst [vmem:[%s2543] sm:$0xff] %v2480
        %2545 = vst [vmem:[%s2543 + $0x8] sm:$0xff] %v2483
        %2546 = vst [vmem:[%s2543 + $0x10] sm:$0xff] %v2488
        %2547 = vst [vmem:[%s2543 + $0x18] sm:$0xff] %v2491
        %2548 = vst [vmem:[%s2543 + $0x20] sm:$0xff] %v2496
        %2549 = vst [vmem:[%s2543 + $0x28] sm:$0xff] %v2499
        %2550 = vst [vmem:[%s2543 + $0x30] sm:$0xff] %v2504
        %2551 = vst [vmem:[%s2543 + $0x38] sm:$0xff] %v2507
        %2552 = vst [vmem:[%s2543 + $0x40] sm:$0xff] %v2512
        %2553 = vst [vmem:[%s2543 + $0x48] sm:$0xff] %v2515
        %2554 = vst [vmem:[%s2543 + $0x50] sm:$0xff] %v2520
        %2555 = vst [vmem:[%s2543 + $0x58] sm:$0xff] %v2523
        %2556 = vst [vmem:[%s2543 + $0x60] sm:$0xff] %v2528
        %2557 = vst [vmem:[%s2543 + $0x68] sm:$0xff] %v2531
        %2558 = vst [vmem:[%s2543 + $0x70] sm:$0xff] %v2536
        %2559 = vst [vmem:[%s2543 + $0x78] sm:$0xff] %v2539
        %s2560 = sand.u32 %s140, 1
        %s2561 = scalar_lea.sflag [#allocation5], %s2560
        %s2562 = sand.u32 %s140, 1
        %s2563 = smul.addr %s2562, 256
        %s2564 = scalar_lea.vmem [#allocation6], %s2563
        // Predicated region
        $region45: #{depthwise_separable_conv2d.1} parent=39 // pred_check
          %p2565 = pneg %p150
        $region46: #{depthwise_separable_conv2d.1} parent=39 // pred_check_branch
          %2567 = sbr.rel (%p2565) target = $region48
        $region47: #{depthwise_separable_conv2d.1} parent=39 // pred_region
          %s2569 = ssub.s32 4096, 4096
          %2570 = vsyncadd %s2561, %s2569
          %s2571 = smul.addr %s22, 32
          %s2572 = smul.addr %s2571, 128
          %s2573 = scalar_lea.hbm %s5, %s2572
          %s2574 = sshll.u32 %s2564, 4
          %s2575 = int_to_ptr.vmem [resolvable:$true] %s2574
          %2580 = dma.vmem_to_hbm [thread:$0]  %s2575, 4096, %s2573, %s2561, 128, 128, 8
        $region48: #{depthwise_separable_conv2d.1} parent=39 // pred_fallthru
          _
      $region40: #{depthwise_separable_conv2d.1} parent=5 // pred_fallthru
        _
      %p2581 = scmp.le.s32.totalorder 2, %s17
      // Predicated region
      $region49: #{depthwise_separable_conv2d.1} parent=5 // pred_check
        %p2582 = pneg %p2581
      $region50: #{depthwise_separable_conv2d.1} parent=5 // pred_check_branch
        %2584 = sbr.rel (%p2582) target = $region52
      $region51: #{depthwise_separable_conv2d.1} parent=5 // pred_region
        %s2585 = ssub.s32 %s17, 2
        // Predicated region
        $region53: #{depthwise_separable_conv2d.1} parent=51 // pred_check
          %p2586 = pneg %p156
        $region54: #{depthwise_separable_conv2d.1} parent=51 // pred_check_branch
          %2588 = sbr.rel (%p2586) target = $region56
        $region55: #{depthwise_separable_conv2d.1} parent=51 // pred_region
          %s2589 = sand.u32 %s141, 1
          %s2590 = scalar_lea.sflag [#allocation5], %s2589
          %s2591 = sand.u32 %s141, 1
          %s2592 = smul.addr %s2591, 256
          %s2593 = scalar_lea.vmem [#allocation6], %s2592
          %2594 = dma.done %s2590, 4096
        $region56: #{depthwise_separable_conv2d.1} parent=51 // pred_fallthru
          _
      $region52: #{depthwise_separable_conv2d.1} parent=5 // pred_fallthru
        _
    $region6: #{depthwise_separable_conv2d.1} parent=1 // loop_footer
      %s21 = sadd.s32 1, %s17
    $region7: #{depthwise_separable_conv2d.1} parent=1 // loop_footer_branch
      %16 = sbr.rel target = $region3
    $region8: #{depthwise_separable_conv2d.1} parent=1 // loop_exit
      _
    %2595 = vsyncpa [#allocation4], 1
    %s2596 = scalar_lea.sflag [#allocation4], 1
    %2597 = vsyncpa %s2596, 1
    %2598 = vsyncpa [#allocation5], 1
    %s2599 = scalar_lea.sflag [#allocation5], 1
    %2600 = vsyncpa %s2599, 1

</llo_original>
